<compile_context>
chip_gen: v5e
topology: v5e:2x2
jax: 0.10.0
libtpu: 0.0.40
codegen_flags: <defaults>
</compile_context>

<pallas_src>
import functools

import jax
import jax.numpy as jnp
import numpy as np
from jax import lax
from jax.experimental import pallas as pl
from jax.experimental.pallas import tpu as pltpu


# --------------------------------- kernel ----------------------------------

def df_module_kernel(xy_ref, w_l1_ref, w_sq_ref, w_df_ref, w_red_ref,
                     w_out_ref, b_ref, o_ref, pad_ref,
                     *, N, H, W, Hp, Cr, Co):
    f32, bf16 = jnp.float32, jnp.bfloat16
    C2 = 2 * Cr
    R1 = N * Hp               # rows per input half (x- or y-branch)
    R2 = 2 * R1               # x and y stacked along rows
    Lr = W * Cr               # lane width of the reduced activation
    L2 = W * C2               # lane width of the merged add|diff activations
    Lo = W * Co               # lane width of one output branch
    OFF = 8                   # top pad rows in the staging scratch
                              # (keeps every scratch store sublane-aligned)

    # ---- one-time setup ---------------------------------------------------
    pad_ref[...] = jnp.zeros(pad_ref.shape, pad_ref.dtype)

    # Row mask: 1.0 on real image rows, 0.0 on the zero-padding rows that
    # separate images (every conv input must have zero padding rows).
    Lm = max(Lr, L2, Lo)
    ridx = lax.broadcasted_iota(jnp.int32, (R2, Lm), 0)
    valid = jnp.logical_and(ridx >= 1, ridx <= H)
    for b in range(1, 2 * N):                            # static small unroll
        lo = b * Hp + 1
        valid = jnp.logical_or(
            valid, jnp.logical_and(ridx >= lo, ridx <= lo + H - 1))
    row_mask = valid.astype(f32)                         # (R2, Lm)

    def mm(a, w):
        # bf16 MXU operands, f32 accumulation; element-wise math stays f32.
        return jnp.dot(a.astype(bf16), w, preferred_element_type=f32)

    def conv3x3(act, w_ref, base, bias, lane_in, n_rows):
        # Stage the (already row-masked) activation into the padded scratch,
        # then accumulate the three vertical taps as static shifted views.
        pad_ref[OFF:OFF + n_rows, 0:lane_in] = act
        acc = mm(pad_ref[OFF - 1:OFF - 1 + n_rows, 0:lane_in], w_ref[base + 0])
        acc = acc + mm(pad_ref[OFF:OFF + n_rows, 0:lane_in], w_ref[base + 1])
        acc = acc + mm(pad_ref[OFF + 1:OFF + 1 + n_rows, 0:lane_in],
                       w_ref[base + 2])
        return jnp.maximum(acc + bias, 0.0)

    # ---- reduction: 1x1 conv + folded BN + ReLU (x and y in one matmul) ----
    z = jnp.maximum(mm(xy_ref[...], w_red_ref[...]) + b_ref[0:1, 0:Lr], 0.0)
    z = z * row_mask[:, 0:Lr]                                      # (R2, Lr)

    # ---- merged densecat add|diff branches (stacked / block-diag weights) --
    t1 = conv3x3(z, w_l1_ref, 0, b_ref[1:2, 0:L2], Lr, R2) * row_mask[:, 0:L2]
    t2 = conv3x3(t1, w_sq_ref, 0, b_ref[2:3, 0:L2], L2, R2) * row_mask[:, 0:L2]
    s12 = t1 + t2
    t3 = conv3x3(s12, w_sq_ref, 3, b_ref[3:4, 0:L2], L2, R2)
    s = s12 + t3                                   # x1+x2+x3 | x1'+x2'+x3'

    # ---- combine x / y halves: [add-sum | |diff|] per pixel (lane select) --
    s_x = s[0:R1, :]
    s_y = s[R1:R2, :]
    add_sel = b_ref[6:7, 0:L2]                     # 1.0 on add lanes, else 0.0
    comb = add_sel * (s_x + s_y) + (1.0 - add_sel) * jnp.abs(s_x - s_y)

    # ---- both conv_out layers (1x1 + BN + ReLU) as one matmul --------------
    xo = jnp.maximum(mm(comb, w_out_ref[...]) + b_ref[4:5, 0:2 * Lo], 0.0)
    x_add = xo[:, 0:Lo]
    x_diff = xo[:, Lo:2 * Lo] * row_mask[0:R1, 0:Lo]   # conv input -> re-mask

    # ---- DF_Module.conv1: 3x3 + BN + ReLU on x_diff, residual add of x_add -
    y = conv3x3(x_diff, w_df_ref, 0, b_ref[5:6, 0:Lo], Lo, R1) + x_add
    o_ref[...] = y


# --------------------------------- wrapper ---------------------------------

def df_module_forward(x1_nhwc, x2_nhwc, kernel_params, *, dim_in, dim_out):
    """x1/x2: (N, H, W, dim_in) f32; kernel_params from make_params()."""
    N, H, W, Cin = x1_nhwc.shape
    assert Cin == dim_in and dim_in % 2 == 0, "reduction conv needs even dim_in"
    Cr, Co = dim_in // 2, dim_out
    C2 = 2 * Cr

    # Padded image height; keep N*Hp a multiple of 8 so the x/y row split and
    # the output block stay sublane-aligned.
    Hp = H + 2
    while (N * Hp) % 8:
        Hp += 1
    R1 = N * Hp

    # Lane-dense padded input slab: rows = (image, padded row), lanes = (w, c).
    xy = jnp.concatenate([x1_nhwc, x2_nhwc], axis=0)          # (2N, H, W, Cin)
    xy = jnp.pad(xy, ((0, 0), (1, Hp - H - 1), (0, 0), (0, 0)))
    xy = xy.reshape(2 * R1, W * Cin).astype(jnp.bfloat16)     # (2R1, W*Cin)

    w_l1, w_sq, w_dfm, w_red, w_out, b_slab = kernel_params

    kern = functools.partial(df_module_kernel,
                             N=N, H=H, W=W, Hp=Hp, Cr=Cr, Co=Co)

    def full_spec(a):
        nd = a.ndim
        return pl.BlockSpec(a.shape, lambda i, _nd=nd: (0,) * _nd)

    scratch_w = max(W * Cr, W * C2, W * Co)
    out2d = pl.pallas_call(
        kern,
        out_shape=jax.ShapeDtypeStruct((R1, W * Co), jnp.float32),
        grid=(1,),
        in_specs=[full_spec(a) for a in (xy, w_l1, w_sq, w_dfm, w_red, w_out,
                                         b_slab)],
        out_specs=pl.BlockSpec((R1, W * Co), lambda i: (0, 0)),
        scratch_shapes=[pltpu.VMEM((2 * R1 + 16, scratch_w), jnp.float32)],
        compiler_params=pltpu.CompilerParams(
            dimension_semantics=("arbitrary",)),
    )(xy, w_l1, w_sq, w_dfm, w_red, w_out, b_slab)

    # Strip padded rows, back to NHWC.
    return out2d.reshape(N, Hp, W, Co)[:, 1:1 + H]


# ---------------------------- param construction ---------------------------

def _toeplitz3(w_hwio, W):
    """(3,3,Ci,Co) conv -> 3 block-Toeplitz matrices (W*Ci, W*Co), one per dy.

    Horizontal taps and SAME zero-padding in W are folded into the matrix."""
    w = np.asarray(w_hwio, np.float32)
    _, _, Ci, Cout = w.shape
    mats = []
    for dy in range(3):
        T = np.zeros((W * Ci, W * Cout), np.float32)
        for wo in range(W):
            for dx in range(3):
                wi = wo + dx - 1
                if 0 <= wi < W:
                    T[wi * Ci:(wi + 1) * Ci, wo * Cout:(wo + 1) * Cout] = w[dy, dx]
        mats.append(T)
    return mats


def _blockdiag_1x1(w, W):
    """(Ci, Co) 1x1 conv -> block-diagonal matrix (W*Ci, W*Co)."""
    w = np.asarray(w, np.float32)
    Ci, Cout = w.shape
    T = np.zeros((W * Ci, W * Cout), np.float32)
    for px in range(W):
        T[px * Ci:(px + 1) * Ci, px * Cout:(px + 1) * Cout] = w
    return T


def _pack_kernel_params(p, W, Cin, Cr, Co):
    C2 = 2 * Cr
    Lo = W * Co
    f = lambda a: np.asarray(a, np.float32)

    # densecat layer 1: shared input -> [add | diff] outputs per pixel.
    w1 = np.concatenate([f(p['a_ws'][0]), f(p['d_ws'][0])], axis=3)

    def bd33(wa, wd):
        w = np.zeros((3, 3, C2, C2), np.float32)
        w[:, :, :Cr, :Cr] = f(wa)
        w[:, :, Cr:, Cr:] = f(wd)
        return w

    w2 = bd33(p['a_ws'][1], p['d_ws'][1])
    w3 = bd33(p['a_ws'][2], p['d_ws'][2])

    w_l1 = np.stack(_toeplitz3(w1, W), 0)                    # (3, W*Cr, W*C2)
    w_sq = np.stack(_toeplitz3(w2, W) + _toeplitz3(w3, W), 0)  # (6, W*C2, W*C2)
    w_dfm = np.stack(_toeplitz3(p['w_df'], W), 0)            # (3, W*Co, W*Co)

    w_red = _blockdiag_1x1(p['wr'], W)                       # (W*Cin, W*Cr)

    # Merged conv_out 1x1: add half -> lanes [0,Lo), diff half -> [Lo, 2Lo).
    a_wo, d_wo = f(p['a_wo']), f(p['d_wo'])
    w_out = np.zeros((W * C2, 2 * Lo), np.float32)
    for px in range(W):
        w_out[px * C2:px * C2 + Cr, px * Co:(px + 1) * Co] = a_wo
        w_out[px * C2 + Cr:(px + 1) * C2, Lo + px * Co:Lo + (px + 1) * Co] = d_wo

    # Bias slab (f32): rows 0..5 biases tiled to lane layout, row 6 = add-lane
    # select (1.0 on the add half of each pixel's C2 lanes).
    bw = max(W * C2, 2 * Lo)

    def tile_c(b):
        return np.tile(f(b), W)

    def row(v):
        out = np.zeros((bw,), np.float32)
        out[:v.shape[0]] = v
        return out

    add_sel = np.tile(np.concatenate([np.ones((Cr,), np.float32),
                                      np.zeros((Cr,), np.float32)]), W)
    b_slab = np.stack([
        row(tile_c(p['br'])),
        row(tile_c(np.concatenate([f(p['a_bs'][0]), f(p['d_bs'][0])]))),
        row(tile_c(np.concatenate([f(p['a_bs'][1]), f(p['d_bs'][1])]))),
        row(tile_c(np.concatenate([f(p['a_bs'][2]), f(p['d_bs'][2])]))),
        row(np.concatenate([tile_c(p['a_bo']), tile_c(p['d_bo'])])),
        row(tile_c(p['b_df'])),
        row(add_sel)], 0)

    bf = jnp.bfloat16
    return (jnp.asarray(w_l1, bf), jnp.asarray(w_sq, bf), jnp.asarray(w_dfm, bf),
            jnp.asarray(w_red, bf), jnp.asarray(w_out, bf),
            jnp.asarray(b_slab, jnp.float32))


def make_params(key, dim_in, dim_out, W):
    """Deterministic synthetic params; BN folded (eval mode).  Conv weights are
    rounded through bf16 so the packed bf16 kernel weights and the f32
    reference use bit-identical values."""
    assert dim_in % 2 == 0, "DF_Module reduction conv needs an even dim_in"
    Cr = dim_in // 2
    Co = dim_out
    eps = 1e-5
    ks = iter(jax.random.split(key, 64))

    def nrm(shape, scale=0.2):
        return scale * jax.random.normal(next(ks), shape, jnp.float32)

    def fold_bn(w, b, gamma, beta):
        # eval-mode BN with running_mean=0, running_var=1
        scale = gamma / jnp.sqrt(1.0 + eps)
        return w * scale, b * scale + beta

    def q(w):  # share bf16-rounded weights between kernel and reference
        return w.astype(jnp.bfloat16).astype(jnp.float32)

    # reduction 1x1 conv (Cin -> Cr) + BN
    wr = nrm((dim_in, Cr))
    br = nrm((Cr,))
    wr, br = fold_bn(wr, br, 1.0 + nrm((Cr,), 0.1), nrm((Cr,), 0.1))
    wr = q(wr)

    def make_cat():
        ws, bs = [], []
        for _ in range(3):                       # three 3x3 convs (Cr -> Cr)
            ws.append(q(nrm((3, 3, Cr, Cr))))
            bs.append(nrm((Cr,)))
        wo = nrm((Cr, Co))                       # 1x1 conv_out + BN
        bo = nrm((Co,))
        wo, bo = fold_bn(wo, bo, 1.0 + nrm((Co,), 0.1), nrm((Co,), 0.1))
        return ws, bs, q(wo), bo

    a_ws, a_bs, a_wo, a_bo = make_cat()
    d_ws, d_bs, d_wo, d_bo = make_cat()

    # DF_Module.conv1: 3x3 (Co -> Co) + BN
    w_df = nrm((3, 3, Co, Co))
    b_df = nrm((Co,))
    w_df, b_df = fold_bn(w_df, b_df, 1.0 + nrm((Co,), 0.1), nrm((Co,), 0.1))
    w_df = q(w_df)

    hwio = dict(wr=wr, br=br,
                a_ws=a_ws, a_bs=a_bs, a_wo=a_wo, a_bo=a_bo,
                d_ws=d_ws, d_bs=d_bs, d_wo=d_wo, d_bo=d_bo,
                w_df=w_df, b_df=b_df)
    kernel_params = _pack_kernel_params(hwio, W, dim_in, Cr, Co)
    return hwio, kernel_params


# ------------------------------ JAX reference -------------------------------

def _conv_ref(x, w_hwio, b):
    out = lax.conv_general_dilated(
        x, w_hwio, (1, 1), 'SAME',
        dimension_numbers=('NHWC', 'HWIO', 'NHWC'),
        precision=lax.Precision.HIGHEST)
    return out + b.reshape(1, 1, 1, -1)


def ref_forward(x1, x2, p):
    r = lambda t: jnp.maximum(t, 0.0)
    wr1x1 = p['wr'].reshape(1, 1, *p['wr'].shape)
    x = r(_conv_ref(x1, wr1x1, p['br']))
    y = r(_conv_ref(x2, wr1x1, p['br']))

    def dense(x, y, ws, bs):
        a1 = r(_conv_ref(x, ws[0], bs[0]))
        a2 = r(_conv_ref(a1, ws[1], bs[1]))
        a3 = r(_conv_ref(a2 + a1, ws[2], bs[2]))
        c1 = r(_conv_ref(y, ws[0], bs[0]))
        c2 = r(_conv_ref(c1, ws[1], bs[1]))
        c3 = r(_conv_ref(c2 + c1, ws[2], bs[2]))
        return a1, a2, a3, c1, c2, c3

    a = dense(x, y, p['a_ws'], p['a_bs'])
    x_add = r(_conv_ref(sum(a), p['a_wo'].reshape(1, 1, *p['a_wo'].shape),
                        p['a_bo']))
    d = dense(x, y, p['d_ws'], p['d_bs'])
    diff = jnp.abs(d[0] + d[1] + d[2] - d[3] - d[4] - d[5])
    x_diff = r(_conv_ref(diff, p['d_wo'].reshape(1, 1, *p['d_wo'].shape),
                         p['d_bo']))
    return r(_conv_ref(x_diff, p['w_df'], p['b_df'])) + x_add


# ----------------------------------- main -----------------------------------

if __name__ == "__main__":
    N, H, W = 2, 16, 16
    dim_in, dim_out = 8, 8

    key = jax.random.PRNGKey(0)
    k_x1, k_x2, k_p = jax.random.split(key, 3)

    # PyTorch-equivalent inputs would be NCHW (2, 8, 16, 16); we use NHWC.
    x1 = jax.random.normal(k_x1, (N, H, W, dim_in), jnp.float32)
    x2 = jax.random.normal(k_x2, (N, H, W, dim_in), jnp.float32)

    hwio_params, kernel_params = make_params(k_p, dim_in, dim_out, W)

    out = df_module_forward(x1, x2, kernel_params,
                            dim_in=dim_in, dim_out=dim_out)
    out = jax.block_until_ready(out)

    ref = jax.block_until_ready(ref_forward(x1, x2, hwio_params))
    # bf16 MXU operands in the kernel (vs. the f32 reference) dominate the
    # tolerance; conv weights are shared bit-exactly between the two.
    np.testing.assert_allclose(np.asarray(out), np.asarray(ref),
                               rtol=3e-2, atol=5e-2)

    print("KERNEL_OK")
</pallas_src>

<mosaic_0001>
module attributes {stable_mosaic.version = 11 : i64} {
  func.func @df_module_kernel(%arg0: i32, %arg1: memref<80x128xbf16, #tpu.memory_space<vmem>>, %arg2: memref<3x64x128xbf16, #tpu.memory_space<vmem>>, %arg3: memref<6x128x128xbf16, #tpu.memory_space<vmem>>, %arg4: memref<3x128x128xbf16, #tpu.memory_space<vmem>>, %arg5: memref<128x64xbf16, #tpu.memory_space<vmem>>, %arg6: memref<128x256xbf16, #tpu.memory_space<vmem>>, %arg7: memref<7x256xf32, #tpu.memory_space<vmem>>, %arg8: memref<40x128xf32, #tpu.memory_space<vmem>>, %arg9: memref<96x128xf32, #tpu.memory_space<vmem>>) attributes {dimension_semantics = [#tpu.dimension_semantics<arbitrary>], iteration_bounds = array<i64: 1>, scalar_prefetch = 0 : i64, scratch_operands = 1 : i64, tpu.core_type = #tpu.core_type<tc>, window_params = [{pipeline_mode = #tpu.pipeline_mode<synchronous>, transform_indices = @transform_0, window_bounds = array<i64: 80, 128>}, {pipeline_mode = #tpu.pipeline_mode<synchronous>, transform_indices = @transform_1, window_bounds = array<i64: 3, 64, 128>}, {pipeline_mode = #tpu.pipeline_mode<synchronous>, transform_indices = @transform_2, window_bounds = array<i64: 6, 128, 128>}, {pipeline_mode = #tpu.pipeline_mode<synchronous>, transform_indices = @transform_3, window_bounds = array<i64: 3, 128, 128>}, {pipeline_mode = #tpu.pipeline_mode<synchronous>, transform_indices = @transform_4, window_bounds = array<i64: 128, 64>}, {pipeline_mode = #tpu.pipeline_mode<synchronous>, transform_indices = @transform_5, window_bounds = array<i64: 128, 256>}, {pipeline_mode = #tpu.pipeline_mode<synchronous>, transform_indices = @transform_6, window_bounds = array<i64: 7, 256>}, {pipeline_mode = #tpu.pipeline_mode<synchronous>, transform_indices = @transform_7, window_bounds = array<i64: 40, 128>}]} {
    %cst = arith.constant 0.000000e+00 : f32
    %0 = vector.broadcast %cst : f32 to vector<96x128xf32>
    %c0 = arith.constant 0 : index
    %c0_0 = arith.constant 0 : index
    %1 = vector.load %arg9[%c0, %c0_0] : memref<96x128xf32, #tpu.memory_space<vmem>>, vector<96x128xf32>
    tpu.vector_store %arg9[%c0, %c0_0], %0 {strides = array<i32>} : memref<96x128xf32, #tpu.memory_space<vmem>>, vector<96x128xf32>,
    %2 = tpu.iota {dimensions = array<i32: 0>} : vector<80x128xi32>
    %c1_i32 = arith.constant 1 : i32
    %3 = vector.broadcast %c1_i32 : i32 to vector<80x128xi32>
    %4 = arith.cmpi sge, %2, %3 : vector<80x128xi32>
    %c16_i32 = arith.constant 16 : i32
    %5 = vector.broadcast %c16_i32 : i32 to vector<80x128xi32>
    %6 = arith.cmpi sle, %2, %5 : vector<80x128xi32>
    %7 = arith.andi %4, %6 : vector<80x128xi1>
    %c21_i32 = arith.constant 21 : i32
    %8 = vector.broadcast %c21_i32 : i32 to vector<80x128xi32>
    %9 = arith.cmpi sge, %2, %8 : vector<80x128xi32>
    %c36_i32 = arith.constant 36 : i32
    %10 = vector.broadcast %c36_i32 : i32 to vector<80x128xi32>
    %11 = arith.cmpi sle, %2, %10 : vector<80x128xi32>
    %12 = arith.andi %9, %11 : vector<80x128xi1>
    %13 = arith.ori %7, %12 : vector<80x128xi1>
    %c41_i32 = arith.constant 41 : i32
    %14 = vector.broadcast %c41_i32 : i32 to vector<80x128xi32>
    %15 = arith.cmpi sge, %2, %14 : vector<80x128xi32>
    %c56_i32 = arith.constant 56 : i32
    %16 = vector.broadcast %c56_i32 : i32 to vector<80x128xi32>
    %17 = arith.cmpi sle, %2, %16 : vector<80x128xi32>
    %18 = arith.andi %15, %17 : vector<80x128xi1>
    %19 = arith.ori %13, %18 : vector<80x128xi1>
    %c61_i32 = arith.constant 61 : i32
    %20 = vector.broadcast %c61_i32 : i32 to vector<80x128xi32>
    %21 = arith.cmpi sge, %2, %20 : vector<80x128xi32>
    %c76_i32 = arith.constant 76 : i32
    %22 = vector.broadcast %c76_i32 : i32 to vector<80x128xi32>
    %23 = arith.cmpi sle, %2, %22 : vector<80x128xi32>
    %24 = arith.andi %21, %23 : vector<80x128xi1>
    %25 = arith.ori %19, %24 : vector<80x128xi1>
    %26 = arith.extui %25 : vector<80x128xi1> to vector<80x128xi32>
    %27 = arith.sitofp %26 : vector<80x128xi32> to vector<80x128xf32>
    %c0_1 = arith.constant 0 : index
    %c0_2 = arith.constant 0 : index
    %28 = vector.load %arg1[%c0_1, %c0_2] : memref<80x128xbf16, #tpu.memory_space<vmem>>, vector<80x128xbf16>
    %c0_3 = arith.constant 0 : index
    %c0_4 = arith.constant 0 : index
    %29 = vector.load %arg5[%c0_3, %c0_4] : memref<128x64xbf16, #tpu.memory_space<vmem>>, vector<128x64xbf16>
    %cst_5 = arith.constant dense<0.000000e+00> : vector<80x64xf32>
    %30 = tpu.matmul %28, %29, %cst_5 {dimension_numbers = #tpu.dot_dimension_numbers<[1], [0], [0], [1], [0, 0, 1, 1], [], []>} : vector<80x128xbf16>, vector<128x64xbf16>, vector<80x64xf32> -> vector<80x64xf32>
    %c0_6 = arith.constant 0 : index
    %c0_7 = arith.constant 0 : index
    %31 = vector.load %arg7[%c0_6, %c0_7] : memref<7x256xf32, #tpu.memory_space<vmem>>, vector<1x64xf32>
    %32 = vector.broadcast %31 : vector<1x64xf32> to vector<80x64xf32>
    %33 = arith.addf %30, %32 : vector<80x64xf32>
    %cst_8 = arith.constant 0.000000e+00 : f32
    %34 = vector.broadcast %cst_8 : f32 to vector<80x64xf32>
    %35 = arith.maximumf %33, %34 : vector<80x64xf32>
    %36 = vector.extract_strided_slice %27 {offsets = [0, 0], sizes = [80, 64], strides = [1, 1]} : vector<80x128xf32> to vector<80x64xf32>
    %37 = arith.mulf %35, %36 : vector<80x64xf32>
    %c1 = arith.constant 1 : index
    %c0_9 = arith.constant 0 : index
    %38 = vector.load %arg7[%c1, %c0_9] : memref<7x256xf32, #tpu.memory_space<vmem>>, vector<1x128xf32>
    %c8 = arith.constant 8 : index
    %c0_10 = arith.constant 0 : index
    %39 = vector.load %arg9[%c8, %c0_10] : memref<96x128xf32, #tpu.memory_space<vmem>>, vector<80x64xf32>
    tpu.vector_store %arg9[%c8, %c0_10], %37 {strides = array<i32>} : memref<96x128xf32, #tpu.memory_space<vmem>>, vector<80x64xf32>,
    %c7 = arith.constant 7 : index
    %c0_11 = arith.constant 0 : index
    %40 = vector.load %arg9[%c7, %c0_11] : memref<96x128xf32, #tpu.memory_space<vmem>>, vector<80x64xf32>
    %c0_12 = arith.constant 0 : index
    %c0_13 = arith.constant 0 : index
    %c0_14 = arith.constant 0 : index
    %41 = vector.load %arg2[%c0_12, %c0_13, %c0_14] : memref<3x64x128xbf16, #tpu.memory_space<vmem>>, vector<1x64x128xbf16>
    %42 = vector.shape_cast %41 : vector<1x64x128xbf16> to vector<64x128xbf16>
    %43 = arith.truncf %40 : vector<80x64xf32> to vector<80x64xbf16>
    %cst_15 = arith.constant dense<0.000000e+00> : vector<80x128xf32>
    %44 = tpu.matmul %43, %42, %cst_15 {dimension_numbers = #tpu.dot_dimension_numbers<[1], [0], [0], [1], [0, 0, 1, 1], [], []>} : vector<80x64xbf16>, vector<64x128xbf16>, vector<80x128xf32> -> vector<80x128xf32>
    %c8_16 = arith.constant 8 : index
    %c0_17 = arith.constant 0 : index
    %45 = vector.load %arg9[%c8_16, %c0_17] : memref<96x128xf32, #tpu.memory_space<vmem>>, vector<80x64xf32>
    %c1_18 = arith.constant 1 : index
    %c0_19 = arith.constant 0 : index
    %c0_20 = arith.constant 0 : index
    %46 = vector.load %arg2[%c1_18, %c0_19, %c0_20] : memref<3x64x128xbf16, #tpu.memory_space<vmem>>, vector<1x64x128xbf16>
    %47 = vector.shape_cast %46 : vector<1x64x128xbf16> to vector<64x128xbf16>
    %48 = arith.truncf %45 : vector<80x64xf32> to vector<80x64xbf16>
    %cst_21 = arith.constant dense<0.000000e+00> : vector<80x128xf32>
    %49 = tpu.matmul %48, %47, %cst_21 {dimension_numbers = #tpu.dot_dimension_numbers<[1], [0], [0], [1], [0, 0, 1, 1], [], []>} : vector<80x64xbf16>, vector<64x128xbf16>, vector<80x128xf32> -> vector<80x128xf32>
    %50 = arith.addf %44, %49 : vector<80x128xf32>
    %c9 = arith.constant 9 : index
    %c0_22 = arith.constant 0 : index
    %51 = vector.load %arg9[%c9, %c0_22] : memref<96x128xf32, #tpu.memory_space<vmem>>, vector<80x64xf32>
    %c2 = arith.constant 2 : index
    %c0_23 = arith.constant 0 : index
    %c0_24 = arith.constant 0 : index
    %52 = vector.load %arg2[%c2, %c0_23, %c0_24] : memref<3x64x128xbf16, #tpu.memory_space<vmem>>, vector<1x64x128xbf16>
    %53 = vector.shape_cast %52 : vector<1x64x128xbf16> to vector<64x128xbf16>
    %54 = arith.truncf %51 : vector<80x64xf32> to vector<80x64xbf16>
    %cst_25 = arith.constant dense<0.000000e+00> : vector<80x128xf32>
    %55 = tpu.matmul %54, %53, %cst_25 {dimension_numbers = #tpu.dot_dimension_numbers<[1], [0], [0], [1], [0, 0, 1, 1], [], []>} : vector<80x64xbf16>, vector<64x128xbf16>, vector<80x128xf32> -> vector<80x128xf32>
    %56 = arith.addf %50, %55 : vector<80x128xf32>
    %57 = vector.broadcast %38 : vector<1x128xf32> to vector<80x128xf32>
    %58 = arith.addf %56, %57 : vector<80x128xf32>
    %cst_26 = arith.constant 0.000000e+00 : f32
    %59 = vector.broadcast %cst_26 : f32 to vector<80x128xf32>
    %60 = arith.maximumf %58, %59 : vector<80x128xf32>
    %61 = arith.mulf %60, %27 : vector<80x128xf32>
    %c2_27 = arith.constant 2 : index
    %c0_28 = arith.constant 0 : index
    %62 = vector.load %arg7[%c2_27, %c0_28] : memref<7x256xf32, #tpu.memory_space<vmem>>, vector<1x128xf32>
    %c8_29 = arith.constant 8 : index
    %c0_30 = arith.constant 0 : index
    %63 = vector.load %arg9[%c8_29, %c0_30] : memref<96x128xf32, #tpu.memory_space<vmem>>, vector<80x128xf32>
    tpu.vector_store %arg9[%c8_29, %c0_30], %61 {strides = array<i32>} : memref<96x128xf32, #tpu.memory_space<vmem>>, vector<80x128xf32>,
    %c7_31 = arith.constant 7 : index
    %c0_32 = arith.constant 0 : index
    %64 = vector.load %arg9[%c7_31, %c0_32] : memref<96x128xf32, #tpu.memory_space<vmem>>, vector<80x128xf32>
    %c0_33 = arith.constant 0 : index
    %c0_34 = arith.constant 0 : index
    %c0_35 = arith.constant 0 : index
    %65 = vector.load %arg3[%c0_33, %c0_34, %c0_35] : memref<6x128x128xbf16, #tpu.memory_space<vmem>>, vector<1x128x128xbf16>
    %66 = vector.shape_cast %65 : vector<1x128x128xbf16> to vector<128x128xbf16>
    %67 = arith.truncf %64 : vector<80x128xf32> to vector<80x128xbf16>
    %cst_36 = arith.constant dense<0.000000e+00> : vector<80x128xf32>
    %68 = tpu.matmul %67, %66, %cst_36 {dimension_numbers = #tpu.dot_dimension_numbers<[1], [0], [0], [1], [0, 0, 1, 1], [], []>} : vector<80x128xbf16>, vector<128x128xbf16>, vector<80x128xf32> -> vector<80x128xf32>
    %c8_37 = arith.constant 8 : index
    %c0_38 = arith.constant 0 : index
    %69 = vector.load %arg9[%c8_37, %c0_38] : memref<96x128xf32, #tpu.memory_space<vmem>>, vector<80x128xf32>
    %c1_39 = arith.constant 1 : index
    %c0_40 = arith.constant 0 : index
    %c0_41 = arith.constant 0 : index
    %70 = vector.load %arg3[%c1_39, %c0_40, %c0_41] : memref<6x128x128xbf16, #tpu.memory_space<vmem>>, vector<1x128x128xbf16>
    %71 = vector.shape_cast %70 : vector<1x128x128xbf16> to vector<128x128xbf16>
    %72 = arith.truncf %69 : vector<80x128xf32> to vector<80x128xbf16>
    %cst_42 = arith.constant dense<0.000000e+00> : vector<80x128xf32>
    %73 = tpu.matmul %72, %71, %cst_42 {dimension_numbers = #tpu.dot_dimension_numbers<[1], [0], [0], [1], [0, 0, 1, 1], [], []>} : vector<80x128xbf16>, vector<128x128xbf16>, vector<80x128xf32> -> vector<80x128xf32>
    %74 = arith.addf %68, %73 : vector<80x128xf32>
    %c9_43 = arith.constant 9 : index
    %c0_44 = arith.constant 0 : index
    %75 = vector.load %arg9[%c9_43, %c0_44] : memref<96x128xf32, #tpu.memory_space<vmem>>, vector<80x128xf32>
    %c2_45 = arith.constant 2 : index
    %c0_46 = arith.constant 0 : index
    %c0_47 = arith.constant 0 : index
    %76 = vector.load %arg3[%c2_45, %c0_46, %c0_47] : memref<6x128x128xbf16, #tpu.memory_space<vmem>>, vector<1x128x128xbf16>
    %77 = vector.shape_cast %76 : vector<1x128x128xbf16> to vector<128x128xbf16>
    %78 = arith.truncf %75 : vector<80x128xf32> to vector<80x128xbf16>
    %cst_48 = arith.constant dense<0.000000e+00> : vector<80x128xf32>
    %79 = tpu.matmul %78, %77, %cst_48 {dimension_numbers = #tpu.dot_dimension_numbers<[1], [0], [0], [1], [0, 0, 1, 1], [], []>} : vector<80x128xbf16>, vector<128x128xbf16>, vector<80x128xf32> -> vector<80x128xf32>
    %80 = arith.addf %74, %79 : vector<80x128xf32>
    %81 = vector.broadcast %62 : vector<1x128xf32> to vector<80x128xf32>
    %82 = arith.addf %80, %81 : vector<80x128xf32>
    %cst_49 = arith.constant 0.000000e+00 : f32
    %83 = vector.broadcast %cst_49 : f32 to vector<80x128xf32>
    %84 = arith.maximumf %82, %83 : vector<80x128xf32>
    %85 = arith.mulf %84, %27 : vector<80x128xf32>
    %86 = arith.addf %61, %85 : vector<80x128xf32>
    %c3 = arith.constant 3 : index
    %c0_50 = arith.constant 0 : index
    %87 = vector.load %arg7[%c3, %c0_50] : memref<7x256xf32, #tpu.memory_space<vmem>>, vector<1x128xf32>
    %c8_51 = arith.constant 8 : index
    %c0_52 = arith.constant 0 : index
    %88 = vector.load %arg9[%c8_51, %c0_52] : memref<96x128xf32, #tpu.memory_space<vmem>>, vector<80x128xf32>
    tpu.vector_store %arg9[%c8_51, %c0_52], %86 {strides = array<i32>} : memref<96x128xf32, #tpu.memory_space<vmem>>, vector<80x128xf32>,
    %c7_53 = arith.constant 7 : index
    %c0_54 = arith.constant 0 : index
    %89 = vector.load %arg9[%c7_53, %c0_54] : memref<96x128xf32, #tpu.memory_space<vmem>>, vector<80x128xf32>
    %c3_55 = arith.constant 3 : index
    %c0_56 = arith.constant 0 : index
    %c0_57 = arith.constant 0 : index
    %90 = vector.load %arg3[%c3_55, %c0_56, %c0_57] : memref<6x128x128xbf16, #tpu.memory_space<vmem>>, vector<1x128x128xbf16>
    %91 = vector.shape_cast %90 : vector<1x128x128xbf16> to vector<128x128xbf16>
    %92 = arith.truncf %89 : vector<80x128xf32> to vector<80x128xbf16>
    %cst_58 = arith.constant dense<0.000000e+00> : vector<80x128xf32>
    %93 = tpu.matmul %92, %91, %cst_58 {dimension_numbers = #tpu.dot_dimension_numbers<[1], [0], [0], [1], [0, 0, 1, 1], [], []>} : vector<80x128xbf16>, vector<128x128xbf16>, vector<80x128xf32> -> vector<80x128xf32>
    %c8_59 = arith.constant 8 : index
    %c0_60 = arith.constant 0 : index
    %94 = vector.load %arg9[%c8_59, %c0_60] : memref<96x128xf32, #tpu.memory_space<vmem>>, vector<80x128xf32>
    %c4 = arith.constant 4 : index
    %c0_61 = arith.constant 0 : index
    %c0_62 = arith.constant 0 : index
    %95 = vector.load %arg3[%c4, %c0_61, %c0_62] : memref<6x128x128xbf16, #tpu.memory_space<vmem>>, vector<1x128x128xbf16>
    %96 = vector.shape_cast %95 : vector<1x128x128xbf16> to vector<128x128xbf16>
    %97 = arith.truncf %94 : vector<80x128xf32> to vector<80x128xbf16>
    %cst_63 = arith.constant dense<0.000000e+00> : vector<80x128xf32>
    %98 = tpu.matmul %97, %96, %cst_63 {dimension_numbers = #tpu.dot_dimension_numbers<[1], [0], [0], [1], [0, 0, 1, 1], [], []>} : vector<80x128xbf16>, vector<128x128xbf16>, vector<80x128xf32> -> vector<80x128xf32>
    %99 = arith.addf %93, %98 : vector<80x128xf32>
    %c9_64 = arith.constant 9 : index
    %c0_65 = arith.constant 0 : index
    %100 = vector.load %arg9[%c9_64, %c0_65] : memref<96x128xf32, #tpu.memory_space<vmem>>, vector<80x128xf32>
    %c5 = arith.constant 5 : index
    %c0_66 = arith.constant 0 : index
    %c0_67 = arith.constant 0 : index
    %101 = vector.load %arg3[%c5, %c0_66, %c0_67] : memref<6x128x128xbf16, #tpu.memory_space<vmem>>, vector<1x128x128xbf16>
    %102 = vector.shape_cast %101 : vector<1x128x128xbf16> to vector<128x128xbf16>
    %103 = arith.truncf %100 : vector<80x128xf32> to vector<80x128xbf16>
    %cst_68 = arith.constant dense<0.000000e+00> : vector<80x128xf32>
    %104 = tpu.matmul %103, %102, %cst_68 {dimension_numbers = #tpu.dot_dimension_numbers<[1], [0], [0], [1], [0, 0, 1, 1], [], []>} : vector<80x128xbf16>, vector<128x128xbf16>, vector<80x128xf32> -> vector<80x128xf32>
    %105 = arith.addf %99, %104 : vector<80x128xf32>
    %106 = vector.broadcast %87 : vector<1x128xf32> to vector<80x128xf32>
    %107 = arith.addf %105, %106 : vector<80x128xf32>
    %cst_69 = arith.constant 0.000000e+00 : f32
    %108 = vector.broadcast %cst_69 : f32 to vector<80x128xf32>
    %109 = arith.maximumf %107, %108 : vector<80x128xf32>
    %110 = arith.addf %86, %109 : vector<80x128xf32>
    %111 = vector.extract_strided_slice %110 {offsets = [0, 0], sizes = [40, 128], strides = [1, 1]} : vector<80x128xf32> to vector<40x128xf32>
    %112 = vector.extract_strided_slice %110 {offsets = [40, 0], sizes = [40, 128], strides = [1, 1]} : vector<80x128xf32> to vector<40x128xf32>
    %c6 = arith.constant 6 : index
    %c0_70 = arith.constant 0 : index
    %113 = vector.load %arg7[%c6, %c0_70] : memref<7x256xf32, #tpu.memory_space<vmem>>, vector<1x128xf32>
    %114 = arith.addf %111, %112 : vector<40x128xf32>
    %115 = vector.broadcast %113 : vector<1x128xf32> to vector<40x128xf32>
    %116 = arith.mulf %115, %114 : vector<40x128xf32>
    %cst_71 = arith.constant 1.000000e+00 : f32
    %117 = vector.broadcast %cst_71 : f32 to vector<1x128xf32>
    %118 = arith.subf %117, %113 : vector<1x128xf32>
    %119 = arith.subf %111, %112 : vector<40x128xf32>
    %120 = math.absf %119 : vector<40x128xf32>
    %121 = vector.broadcast %118 : vector<1x128xf32> to vector<40x128xf32>
    %122 = arith.mulf %121, %120 : vector<40x128xf32>
    %123 = arith.addf %116, %122 : vector<40x128xf32>
    %c0_72 = arith.constant 0 : index
    %c0_73 = arith.constant 0 : index
    %124 = vector.load %arg6[%c0_72, %c0_73] : memref<128x256xbf16, #tpu.memory_space<vmem>>, vector<128x256xbf16>
    %125 = arith.truncf %123 : vector<40x128xf32> to vector<40x128xbf16>
    %cst_74 = arith.constant dense<0.000000e+00> : vector<40x256xf32>
    %126 = tpu.matmul %125, %124, %cst_74 {dimension_numbers = #tpu.dot_dimension_numbers<[1], [0], [0], [1], [0, 0, 1, 1], [], []>} : vector<40x128xbf16>, vector<128x256xbf16>, vector<40x256xf32> -> vector<40x256xf32>
    %c4_75 = arith.constant 4 : index
    %c0_76 = arith.constant 0 : index
    %127 = vector.load %arg7[%c4_75, %c0_76] : memref<7x256xf32, #tpu.memory_space<vmem>>, vector<1x256xf32>
    %128 = vector.broadcast %127 : vector<1x256xf32> to vector<40x256xf32>
    %129 = arith.addf %126, %128 : vector<40x256xf32>
    %cst_77 = arith.constant 0.000000e+00 : f32
    %130 = vector.broadcast %cst_77 : f32 to vector<40x256xf32>
    %131 = arith.maximumf %129, %130 : vector<40x256xf32>
    %132 = vector.extract_strided_slice %131 {offsets = [0, 0], sizes = [40, 128], strides = [1, 1]} : vector<40x256xf32> to vector<40x128xf32>
    %133 = vector.extract_strided_slice %131 {offsets = [0, 128], sizes = [40, 128], strides = [1, 1]} : vector<40x256xf32> to vector<40x128xf32>
    %134 = vector.extract_strided_slice %27 {offsets = [0, 0], sizes = [40, 128], strides = [1, 1]} : vector<80x128xf32> to vector<40x128xf32>
    %135 = arith.mulf %133, %134 : vector<40x128xf32>
    %c5_78 = arith.constant 5 : index
    %c0_79 = arith.constant 0 : index
    %136 = vector.load %arg7[%c5_78, %c0_79] : memref<7x256xf32, #tpu.memory_space<vmem>>, vector<1x128xf32>
    %c8_80 = arith.constant 8 : index
    %c0_81 = arith.constant 0 : index
    %137 = vector.load %arg9[%c8_80, %c0_81] : memref<96x128xf32, #tpu.memory_space<vmem>>, vector<40x128xf32>
    tpu.vector_store %arg9[%c8_80, %c0_81], %135 {strides = array<i32>} : memref<96x128xf32, #tpu.memory_space<vmem>>, vector<40x128xf32>,
    %c7_82 = arith.constant 7 : index
    %c0_83 = arith.constant 0 : index
    %138 = vector.load %arg9[%c7_82, %c0_83] : memref<96x128xf32, #tpu.memory_space<vmem>>, vector<40x128xf32>
    %c0_84 = arith.constant 0 : index
    %c0_85 = arith.constant 0 : index
    %c0_86 = arith.constant 0 : index
    %139 = vector.load %arg4[%c0_84, %c0_85, %c0_86] : memref<3x128x128xbf16, #tpu.memory_space<vmem>>, vector<1x128x128xbf16>
    %140 = vector.shape_cast %139 : vector<1x128x128xbf16> to vector<128x128xbf16>
    %141 = arith.truncf %138 : vector<40x128xf32> to vector<40x128xbf16>
    %cst_87 = arith.constant dense<0.000000e+00> : vector<40x128xf32>
    %142 = tpu.matmul %141, %140, %cst_87 {dimension_numbers = #tpu.dot_dimension_numbers<[1], [0], [0], [1], [0, 0, 1, 1], [], []>} : vector<40x128xbf16>, vector<128x128xbf16>, vector<40x128xf32> -> vector<40x128xf32>
    %c8_88 = arith.constant 8 : index
    %c0_89 = arith.constant 0 : index
    %143 = vector.load %arg9[%c8_88, %c0_89] : memref<96x128xf32, #tpu.memory_space<vmem>>, vector<40x128xf32>
    %c1_90 = arith.constant 1 : index
    %c0_91 = arith.constant 0 : index
    %c0_92 = arith.constant 0 : index
    %144 = vector.load %arg4[%c1_90, %c0_91, %c0_92] : memref<3x128x128xbf16, #tpu.memory_space<vmem>>, vector<1x128x128xbf16>
    %145 = vector.shape_cast %144 : vector<1x128x128xbf16> to vector<128x128xbf16>
    %146 = arith.truncf %143 : vector<40x128xf32> to vector<40x128xbf16>
    %cst_93 = arith.constant dense<0.000000e+00> : vector<40x128xf32>
    %147 = tpu.matmul %146, %145, %cst_93 {dimension_numbers = #tpu.dot_dimension_numbers<[1], [0], [0], [1], [0, 0, 1, 1], [], []>} : vector<40x128xbf16>, vector<128x128xbf16>, vector<40x128xf32> -> vector<40x128xf32>
    %148 = arith.addf %142, %147 : vector<40x128xf32>
    %c9_94 = arith.constant 9 : index
    %c0_95 = arith.constant 0 : index
    %149 = vector.load %arg9[%c9_94, %c0_95] : memref<96x128xf32, #tpu.memory_space<vmem>>, vector<40x128xf32>
    %c2_96 = arith.constant 2 : index
    %c0_97 = arith.constant 0 : index
    %c0_98 = arith.constant 0 : index
    %150 = vector.load %arg4[%c2_96, %c0_97, %c0_98] : memref<3x128x128xbf16, #tpu.memory_space<vmem>>, vector<1x128x128xbf16>
    %151 = vector.shape_cast %150 : vector<1x128x128xbf16> to vector<128x128xbf16>
    %152 = arith.truncf %149 : vector<40x128xf32> to vector<40x128xbf16>
    %cst_99 = arith.constant dense<0.000000e+00> : vector<40x128xf32>
    %153 = tpu.matmul %152, %151, %cst_99 {dimension_numbers = #tpu.dot_dimension_numbers<[1], [0], [0], [1], [0, 0, 1, 1], [], []>} : vector<40x128xbf16>, vector<128x128xbf16>, vector<40x128xf32> -> vector<40x128xf32>
    %154 = arith.addf %148, %153 : vector<40x128xf32>
    %155 = vector.broadcast %136 : vector<1x128xf32> to vector<40x128xf32>
    %156 = arith.addf %154, %155 : vector<40x128xf32>
    %cst_100 = arith.constant 0.000000e+00 : f32
    %157 = vector.broadcast %cst_100 : f32 to vector<40x128xf32>
    %158 = arith.maximumf %156, %157 : vector<40x128xf32>
    %159 = arith.addf %158, %132 : vector<40x128xf32>
    %c0_101 = arith.constant 0 : index
    %c0_102 = arith.constant 0 : index
    %160 = vector.load %arg8[%c0_101, %c0_102] : memref<40x128xf32, #tpu.memory_space<vmem>>, vector<40x128xf32>
    tpu.vector_store %arg8[%c0_101, %c0_102], %159 {strides = array<i32>} : memref<40x128xf32, #tpu.memory_space<vmem>>, vector<40x128xf32>,
    return
  }
  func.func @transform_0(%arg0: i32) -> (i32, i32) {
    %c0_i32 = arith.constant 0 : i32
    %c0_i32_0 = arith.constant 0 : i32
    %c0_i32_1 = arith.constant 0 : i32
    return %c0_i32, %c0_i32_0 : i32, i32
  }
  func.func @transform_1(%arg0: i32) -> (i32, i32, i32) {
    %c0_i32 = arith.constant 0 : i32
    %c0_i32_0 = arith.constant 0 : i32
    %c0_i32_1 = arith.constant 0 : i32
    %c0_i32_2 = arith.constant 0 : i32
    return %c0_i32, %c0_i32_0, %c0_i32_1 : i32, i32, i32
  }
  func.func @transform_2(%arg0: i32) -> (i32, i32, i32) {
    %c0_i32 = arith.constant 0 : i32
    %c0_i32_0 = arith.constant 0 : i32
    %c0_i32_1 = arith.constant 0 : i32
    %c0_i32_2 = arith.constant 0 : i32
    return %c0_i32, %c0_i32_0, %c0_i32_1 : i32, i32, i32
  }
  func.func @transform_3(%arg0: i32) -> (i32, i32, i32) {
    %c0_i32 = arith.constant 0 : i32
    %c0_i32_0 = arith.constant 0 : i32
    %c0_i32_1 = arith.constant 0 : i32
    %c0_i32_2 = arith.constant 0 : i32
    return %c0_i32, %c0_i32_0, %c0_i32_1 : i32, i32, i32
  }
  func.func @transform_4(%arg0: i32) -> (i32, i32) {
    %c0_i32 = arith.constant 0 : i32
    %c0_i32_0 = arith.constant 0 : i32
    %c0_i32_1 = arith.constant 0 : i32
    return %c0_i32, %c0_i32_0 : i32, i32
  }
  func.func @transform_5(%arg0: i32) -> (i32, i32) {
    %c0_i32 = arith.constant 0 : i32
    %c0_i32_0 = arith.constant 0 : i32
    %c0_i32_1 = arith.constant 0 : i32
    return %c0_i32, %c0_i32_0 : i32, i32
  }
  func.func @transform_6(%arg0: i32) -> (i32, i32) {
    %c0_i32 = arith.constant 0 : i32
    %c0_i32_0 = arith.constant 0 : i32
    %c0_i32_1 = arith.constant 0 : i32
    return %c0_i32, %c0_i32_0 : i32, i32
  }
  func.func @transform_7(%arg0: i32) -> (i32, i32) {
    %c0_i32 = arith.constant 0 : i32
    %c0_i32_0 = arith.constant 0 : i32
    %c0_i32_1 = arith.constant 0 : i32
    return %c0_i32, %c0_i32_0 : i32, i32
  }
}

</mosaic_0001>

<llo_original>
// kernel: tpu_custom_call.1
$region0: #{tpu_custom_call.1}
  #allocation0 [shape = 'u32[]', space=smem, size = 0x4, offset = 0x4, fixed_abs, tag = 'smem constant byte address 0x4 - core index']
  #allocation1 [shape = 'u32[72,128]{1,0:T(1,128)}', space=vmem, size = 0x9000, scoped, tag = 'internal scratch']
  #allocation2 [shape = 'f32[96,128]{1,0:T(8,128)}', space=vmem, size = 0xc000, scoped, tag = 'scratch operand']
  %s0 = inlined_call_operand.hbm [shape: bf16[80,128], index: 0, kind: input, shape index: {}]
  %s1 = inlined_call_operand.vmem [shape: bf16[3,64,128], index: 1, kind: input, shape index: {}]
  %s2 = inlined_call_operand.hbm [shape: bf16[6,128,128], index: 2, kind: input, shape index: {}]
  %s3 = inlined_call_operand.hbm [shape: bf16[3,128,128], index: 3, kind: input, shape index: {}]
  %s4 = inlined_call_operand.vmem [shape: bf16[128,64], index: 4, kind: input, shape index: {}]
  %s5 = inlined_call_operand.hbm [shape: bf16[128,256], index: 5, kind: input, shape index: {}]
  %s6 = inlined_call_operand.hbm [shape: f32[7,256], index: 6, kind: input, shape index: {}]
  %s7 = inlined_call_operand.hbm [shape: f32[40,128], index: 7, kind: output, shape index: {}]
  %s8 = sld [smem:[#allocation0]]
  $region58: #{tpu_custom_call.1} parent=0
    _
  %s10 = ssub.s32 1, %s8
  %s11 = scalar_select 0, %s10, %s8
  $region1: #{tpu_custom_call.1} parent=0
    #allocation3 [shape = 'u8[20480]{0}', space=vmem, size = 0x5000, scoped, tag = 'input window, operand 0, single buffered']
    #allocation4 [shape = 's32[1]{0}', space=sflag, size = 0x4, scoped, tag = 'scoped memory for tpu_custom_call.1']
    #allocation5 [shape = 's32[1]{0}', space=sflag, size = 0x4, scoped, tag = 'scoped memory for tpu_custom_call.1']
    #allocation6 [shape = 'u8[196608]{0}', space=vmem, size = 0x30000, scoped, tag = 'input window, operand 2, single buffered']
    #allocation7 [shape = 's32[1]{0}', space=sflag, size = 0x4, scoped, tag = 'scoped memory for tpu_custom_call.1']
    #allocation8 [shape = 'u8[98304]{0}', space=vmem, size = 0x18000, scoped, tag = 'input window, operand 3, single buffered']
    #allocation9 [shape = 'u8[65536]{0}', space=vmem, size = 0x10000, scoped, tag = 'input window, operand 5, single buffered']
    #allocation10 [shape = 's32[1]{0}', space=sflag, size = 0x4, scoped, tag = 'scoped memory for tpu_custom_call.1']
    #allocation11 [shape = 'u8[8192]{0}', space=vmem, size = 0x2000, scoped, tag = 'input window, operand 6, single buffered']
    #allocation12 [shape = 'u8[20480]{0}', space=vmem, size = 0x5000, scoped, tag = 'output window, operand 0, single buffered']
    %12 = vsyncpa [#allocation4], 0
    %13 = vsyncpa [#allocation7], 0
    %14 = vsyncpa [#allocation10], 0
    %15 = vsyncpa [#allocation5], 0
    // Predicated region
    $region2: #{tpu_custom_call.1} parent=1 // pred_check
      _
    $region3: #{tpu_custom_call.1} parent=1 // pred_check_branch
      %17 = sbr.rel (0) target = $region5
    $region4: #{tpu_custom_call.1} parent=1 // pred_region
      %19 = vsyncadd [#allocation4], 0
      %s20 = sshll.u32 %s0, 4
      %s21 = int_to_ptr.hbm [resolvable:$true] %s20
      %s22 = sshll.u32 [#allocation3], 4
      %s23 = int_to_ptr.vmem [resolvable:$true] %s22
      %28 = dma.hbm_to_vmem [thread:$0]  %s21, 640, %s23, [#allocation4], 64, 64, 4
    $region5: #{tpu_custom_call.1} parent=1 // pred_fallthru
      _
    // Predicated region
    $region6: #{tpu_custom_call.1} parent=1 // pred_check
      _
    $region7: #{tpu_custom_call.1} parent=1 // pred_check_branch
      %30 = sbr.rel (0) target = $region9
    $region8: #{tpu_custom_call.1} parent=1 // pred_region
      _
    $region9: #{tpu_custom_call.1} parent=1 // pred_fallthru
      _
    // Predicated region
    $region10: #{tpu_custom_call.1} parent=1 // pred_check
      _
    $region11: #{tpu_custom_call.1} parent=1 // pred_check_branch
      %32 = sbr.rel (0) target = $region13
    $region12: #{tpu_custom_call.1} parent=1 // pred_region
      %34 = vsyncadd [#allocation7], 0
      %s35 = sshll.u32 %s2, 4
      %s36 = int_to_ptr.hbm [resolvable:$true] %s35
      %s37 = sshll.u32 [#allocation6], 4
      %s38 = int_to_ptr.vmem [resolvable:$true] %s37
      %43 = dma.hbm_to_vmem [thread:$0]  %s36, 6144, %s38, [#allocation7], 64, 64, 4
    $region13: #{tpu_custom_call.1} parent=1 // pred_fallthru
      _
    // Predicated region
    $region14: #{tpu_custom_call.1} parent=1 // pred_check
      _
    $region15: #{tpu_custom_call.1} parent=1 // pred_check_branch
      %45 = sbr.rel (0) target = $region17
    $region16: #{tpu_custom_call.1} parent=1 // pred_region
      %47 = vsyncadd [#allocation7], 0
      %s48 = sshll.u32 %s3, 4
      %s49 = int_to_ptr.hbm [resolvable:$true] %s48
      %s50 = sshll.u32 [#allocation8], 4
      %s51 = int_to_ptr.vmem [resolvable:$true] %s50
      %56 = dma.hbm_to_vmem [thread:$0]  %s49, 3072, %s51, [#allocation7], 64, 64, 4
    $region17: #{tpu_custom_call.1} parent=1 // pred_fallthru
      _
    // Predicated region
    $region18: #{tpu_custom_call.1} parent=1 // pred_check
      _
    $region19: #{tpu_custom_call.1} parent=1 // pred_check_branch
      %58 = sbr.rel (0) target = $region21
    $region20: #{tpu_custom_call.1} parent=1 // pred_region
      _
    $region21: #{tpu_custom_call.1} parent=1 // pred_fallthru
      _
    // Predicated region
    $region22: #{tpu_custom_call.1} parent=1 // pred_check
      _
    $region23: #{tpu_custom_call.1} parent=1 // pred_check_branch
      %60 = sbr.rel (0) target = $region25
    $region24: #{tpu_custom_call.1} parent=1 // pred_region
      %62 = vsyncadd [#allocation10], 0
      %s63 = sshll.u32 %s5, 4
      %s64 = int_to_ptr.hbm [resolvable:$true] %s63
      %s65 = sshll.u32 [#allocation9], 4
      %s66 = int_to_ptr.vmem [resolvable:$true] %s65
      %71 = dma.hbm_to_vmem [thread:$0]  %s64, 2048, %s66, [#allocation10], 128, 128, 8
    $region25: #{tpu_custom_call.1} parent=1 // pred_fallthru
      _
    // Predicated region
    $region26: #{tpu_custom_call.1} parent=1 // pred_check
      _
    $region27: #{tpu_custom_call.1} parent=1 // pred_check_branch
      %73 = sbr.rel (0) target = $region29
    $region28: #{tpu_custom_call.1} parent=1 // pred_region
      %75 = vsyncadd [#allocation10], 0
      %s77 = sshll.u32 %s6, 4
      %s78 = int_to_ptr.hbm [resolvable:$true] %s77
      %s79 = sshll.u32 [#allocation11], 4
      %s80 = int_to_ptr.vmem [resolvable:$true] %s79
      %82 = dma.hbm_to_vmem [thread:$0]  %s78, 256, %s80, [#allocation10]
    $region29: #{tpu_custom_call.1} parent=1 // pred_fallthru
      _
    // Predicated region
    $region30: #{tpu_custom_call.1} parent=1 // pred_check
      _
    $region31: #{tpu_custom_call.1} parent=1 // pred_check_branch
      %84 = sbr.rel (0) target = $region33
    $region32: #{tpu_custom_call.1} parent=1 // pred_region
      %86 = dma.done [#allocation4], 640
    $region33: #{tpu_custom_call.1} parent=1 // pred_fallthru
      _
    // Predicated region
    $region34: #{tpu_custom_call.1} parent=1 // pred_check
      _
    $region35: #{tpu_custom_call.1} parent=1 // pred_check_branch
      %88 = sbr.rel (0) target = $region37
    $region36: #{tpu_custom_call.1} parent=1 // pred_region
      %90 = dma.done [#allocation7], 6144
    $region37: #{tpu_custom_call.1} parent=1 // pred_fallthru
      _
    // Predicated region
    $region38: #{tpu_custom_call.1} parent=1 // pred_check
      _
    $region39: #{tpu_custom_call.1} parent=1 // pred_check_branch
      %92 = sbr.rel (0) target = $region41
    $region40: #{tpu_custom_call.1} parent=1 // pred_region
      %94 = dma.done [#allocation7], 3072
    $region41: #{tpu_custom_call.1} parent=1 // pred_fallthru
      _
    // Predicated region
    $region42: #{tpu_custom_call.1} parent=1 // pred_check
      _
    $region43: #{tpu_custom_call.1} parent=1 // pred_check_branch
      %96 = sbr.rel (0) target = $region45
    $region44: #{tpu_custom_call.1} parent=1 // pred_region
      %98 = dma.done [#allocation10], 2048
    $region45: #{tpu_custom_call.1} parent=1 // pred_fallthru
      _
    // Predicated region
    $region46: #{tpu_custom_call.1} parent=1 // pred_check
      _
    $region47: #{tpu_custom_call.1} parent=1 // pred_check_branch
      %100 = sbr.rel (0) target = $region49
    $region48: #{tpu_custom_call.1} parent=1 // pred_region
      %102 = dma.done [#allocation10], 256
    $region49: #{tpu_custom_call.1} parent=1 // pred_fallthru
      _
    %104 = vst [vmem:[#allocation2] sm:$0xff] 0.0
    %105 = vst [vmem:[#allocation2 + $0x8] sm:$0xff] 0.0
    %106 = vst [vmem:[#allocation2 + $0x10] sm:$0xff] 0.0
    %107 = vst [vmem:[#allocation2 + $0x18] sm:$0xff] 0.0
    %108 = vst [vmem:[#allocation2 + $0x20] sm:$0xff] 0.0
    %109 = vst [vmem:[#allocation2 + $0x28] sm:$0xff] 0.0
    %110 = vst [vmem:[#allocation2 + $0x30] sm:$0xff] 0.0
    %111 = vst [vmem:[#allocation2 + $0x38] sm:$0xff] 0.0
    %112 = vst [vmem:[#allocation2 + $0x40] sm:$0xff] 0.0
    %113 = vst [vmem:[#allocation2 + $0x48] sm:$0xff] 0.0
    %114 = vst [vmem:[#allocation2 + $0x50] sm:$0xff] 0.0
    %115 = vst [vmem:[#allocation2 + $0x58] sm:$0xff] 0.0
    %v116 = vlaneseq
    %v117 = vshrl.u32 %v116, 7
    %v118 = vadd.s32 %v117, 8
    %v119 = vadd.s32 %v117, 16
    %v120 = vadd.s32 %v117, 24
    %v121 = vadd.s32 %v117, 32
    %v122 = vadd.s32 %v117, 40
    %v123 = vadd.s32 %v117, 48
    %v124 = vadd.s32 %v117, 56
    %v125 = vadd.s32 %v117, 64
    %v126 = vadd.s32 %v117, 72
    %vm127 = vcmp.ge.s32.totalorder %v117, 1
    %vm128 = vcmp.ge.s32.totalorder %v118, 1
    %vm129 = vcmp.ge.s32.totalorder %v119, 1
    %vm130 = vcmp.ge.s32.totalorder %v120, 1
    %vm131 = vcmp.ge.s32.totalorder %v121, 1
    %vm132 = vcmp.ge.s32.totalorder %v122, 1
    %vm133 = vcmp.ge.s32.totalorder %v123, 1
    %vm134 = vcmp.ge.s32.totalorder %v124, 1
    %vm135 = vcmp.ge.s32.totalorder %v125, 1
    %vm136 = vcmp.ge.s32.totalorder %v126, 1
    %vm137 = vcmp.le.s32.totalorder %v117, 16
    %vm138 = vcmp.le.s32.totalorder %v118, 16
    %vm139 = vcmp.le.s32.totalorder %v119, 16
    %vm140 = vcmp.le.s32.totalorder %v120, 16
    %vm141 = vcmp.le.s32.totalorder %v121, 16
    %vm142 = vcmp.le.s32.totalorder %v122, 16
    %vm143 = vcmp.le.s32.totalorder %v123, 16
    %vm144 = vcmp.le.s32.totalorder %v124, 16
    %vm145 = vcmp.le.s32.totalorder %v125, 16
    %vm146 = vcmp.le.s32.totalorder %v126, 16
    %vm147 = vmand %vm127, %vm137
    %vm148 = vmand %vm128, %vm138
    %vm149 = vmand %vm129, %vm139
    %vm150 = vmand %vm130, %vm140
    %vm151 = vmand %vm131, %vm141
    %vm152 = vmand %vm132, %vm142
    %vm153 = vmand %vm133, %vm143
    %vm154 = vmand %vm134, %vm144
    %vm155 = vmand %vm135, %vm145
    %vm156 = vmand %vm136, %vm146
    %vm157 = vcmp.ge.s32.totalorder %v117, 21
    %vm158 = vcmp.ge.s32.totalorder %v118, 21
    %vm159 = vcmp.ge.s32.totalorder %v119, 21
    %vm160 = vcmp.ge.s32.totalorder %v120, 21
    %vm161 = vcmp.ge.s32.totalorder %v121, 21
    %vm162 = vcmp.ge.s32.totalorder %v122, 21
    %vm163 = vcmp.ge.s32.totalorder %v123, 21
    %vm164 = vcmp.ge.s32.totalorder %v124, 21
    %vm165 = vcmp.ge.s32.totalorder %v125, 21
    %vm166 = vcmp.ge.s32.totalorder %v126, 21
    %vm167 = vcmp.le.s32.totalorder %v117, 36
    %vm168 = vcmp.le.s32.totalorder %v118, 36
    %vm169 = vcmp.le.s32.totalorder %v119, 36
    %vm170 = vcmp.le.s32.totalorder %v120, 36
    %vm171 = vcmp.le.s32.totalorder %v121, 36
    %vm172 = vcmp.le.s32.totalorder %v122, 36
    %vm173 = vcmp.le.s32.totalorder %v123, 36
    %vm174 = vcmp.le.s32.totalorder %v124, 36
    %vm175 = vcmp.le.s32.totalorder %v125, 36
    %vm176 = vcmp.le.s32.totalorder %v126, 36
    %vm177 = vmand %vm157, %vm167
    %vm178 = vmand %vm158, %vm168
    %vm179 = vmand %vm159, %vm169
    %vm180 = vmand %vm160, %vm170
    %vm181 = vmand %vm161, %vm171
    %vm182 = vmand %vm162, %vm172
    %vm183 = vmand %vm163, %vm173
    %vm184 = vmand %vm164, %vm174
    %vm185 = vmand %vm165, %vm175
    %vm186 = vmand %vm166, %vm176
    %vm187 = vmor %vm147, %vm177
    %vm188 = vmor %vm148, %vm178
    %vm189 = vmor %vm149, %vm179
    %vm190 = vmor %vm150, %vm180
    %vm191 = vmor %vm151, %vm181
    %vm192 = vmor %vm152, %vm182
    %vm193 = vmor %vm153, %vm183
    %vm194 = vmor %vm154, %vm184
    %vm195 = vmor %vm155, %vm185
    %vm196 = vmor %vm156, %vm186
    %vm197 = vcmp.ge.s32.totalorder %v117, 41
    %vm198 = vcmp.ge.s32.totalorder %v118, 41
    %vm199 = vcmp.ge.s32.totalorder %v119, 41
    %vm200 = vcmp.ge.s32.totalorder %v120, 41
    %vm201 = vcmp.ge.s32.totalorder %v121, 41
    %vm202 = vcmp.ge.s32.totalorder %v122, 41
    %vm203 = vcmp.ge.s32.totalorder %v123, 41
    %vm204 = vcmp.ge.s32.totalorder %v124, 41
    %vm205 = vcmp.ge.s32.totalorder %v125, 41
    %vm206 = vcmp.ge.s32.totalorder %v126, 41
    %vm207 = vcmp.le.s32.totalorder %v117, 56
    %vm208 = vcmp.le.s32.totalorder %v118, 56
    %vm209 = vcmp.le.s32.totalorder %v119, 56
    %vm210 = vcmp.le.s32.totalorder %v120, 56
    %vm211 = vcmp.le.s32.totalorder %v121, 56
    %vm212 = vcmp.le.s32.totalorder %v122, 56
    %vm213 = vcmp.le.s32.totalorder %v123, 56
    %vm214 = vcmp.le.s32.totalorder %v124, 56
    %vm215 = vcmp.le.s32.totalorder %v125, 56
    %vm216 = vcmp.le.s32.totalorder %v126, 56
    %vm217 = vmand %vm197, %vm207
    %vm218 = vmand %vm198, %vm208
    %vm219 = vmand %vm199, %vm209
    %vm220 = vmand %vm200, %vm210
    %vm221 = vmand %vm201, %vm211
    %vm222 = vmand %vm202, %vm212
    %vm223 = vmand %vm203, %vm213
    %vm224 = vmand %vm204, %vm214
    %vm225 = vmand %vm205, %vm215
    %vm226 = vmand %vm206, %vm216
    %vm227 = vmor %vm187, %vm217
    %vm228 = vmor %vm188, %vm218
    %vm229 = vmor %vm189, %vm219
    %vm230 = vmor %vm190, %vm220
    %vm231 = vmor %vm191, %vm221
    %vm232 = vmor %vm192, %vm222
    %vm233 = vmor %vm193, %vm223
    %vm234 = vmor %vm194, %vm224
    %vm235 = vmor %vm195, %vm225
    %vm236 = vmor %vm196, %vm226
    %vm237 = vcmp.ge.s32.totalorder %v117, 61
    %vm238 = vcmp.ge.s32.totalorder %v118, 61
    %vm239 = vcmp.ge.s32.totalorder %v119, 61
    %vm240 = vcmp.ge.s32.totalorder %v120, 61
    %vm241 = vcmp.ge.s32.totalorder %v121, 61
    %vm242 = vcmp.ge.s32.totalorder %v122, 61
    %vm243 = vcmp.ge.s32.totalorder %v123, 61
    %vm244 = vcmp.ge.s32.totalorder %v124, 61
    %vm245 = vcmp.ge.s32.totalorder %v125, 61
    %vm246 = vcmp.ge.s32.totalorder %v126, 61
    %vm247 = vcmp.le.s32.totalorder %v117, 76
    %vm248 = vcmp.le.s32.totalorder %v118, 76
    %vm249 = vcmp.le.s32.totalorder %v119, 76
    %vm250 = vcmp.le.s32.totalorder %v120, 76
    %vm251 = vcmp.le.s32.totalorder %v121, 76
    %vm252 = vcmp.le.s32.totalorder %v122, 76
    %vm253 = vcmp.le.s32.totalorder %v123, 76
    %vm254 = vcmp.le.s32.totalorder %v124, 76
    %vm255 = vcmp.le.s32.totalorder %v125, 76
    %vm256 = vcmp.le.s32.totalorder %v126, 76
    %vm257 = vmand %vm237, %vm247
    %vm258 = vmand %vm238, %vm248
    %vm259 = vmand %vm239, %vm249
    %vm260 = vmand %vm240, %vm250
    %vm261 = vmand %vm241, %vm251
    %vm262 = vmand %vm242, %vm252
    %vm263 = vmand %vm243, %vm253
    %vm264 = vmand %vm244, %vm254
    %vm265 = vmand %vm245, %vm255
    %vm266 = vmand %vm246, %vm256
    %vm267 = vmor %vm227, %vm257
    %vm268 = vmor %vm228, %vm258
    %vm269 = vmor %vm229, %vm259
    %vm270 = vmor %vm230, %vm260
    %vm271 = vmor %vm231, %vm261
    %vm272 = vmor %vm232, %vm262
    %vm273 = vmor %vm233, %vm263
    %vm274 = vmor %vm234, %vm264
    %vm275 = vmor %vm235, %vm265
    %vm276 = vmor %vm236, %vm266
    %v277 = vsel %vm267, 1, 0
    %v278 = vsel %vm268, 1, 0
    %v279 = vsel %vm269, 1, 0
    %v280 = vsel %vm270, 1, 0
    %v281 = vsel %vm271, 1, 0
    %v282 = vsel %vm272, 1, 0
    %v283 = vsel %vm273, 1, 0
    %v284 = vsel %vm274, 1, 0
    %v285 = vsel %vm275, 1, 0
    %v286 = vsel %vm276, 1, 0
    %v287 = vcvt.s32.f32 %v277
    %v288 = vcvt.s32.f32 %v278
    %v289 = vcvt.s32.f32 %v279
    %v290 = vcvt.s32.f32 %v280
    %v291 = vcvt.s32.f32 %v281
    %v292 = vcvt.s32.f32 %v282
    %v293 = vcvt.s32.f32 %v283
    %v294 = vcvt.s32.f32 %v284
    %v295 = vcvt.s32.f32 %v285
    %v296 = vcvt.s32.f32 %v286
    %v297 = vld [vmem:[#allocation3] sm:$0xf]
    %v298 = vld [vmem:[#allocation3 + $0x4] sm:$0xf]
    %v299 = vld [vmem:[#allocation3 + $0x8] sm:$0xf]
    %v300 = vld [vmem:[#allocation3 + $0xc] sm:$0xf]
    %v301 = vld [vmem:[#allocation3 + $0x10] sm:$0xf]
    %v302 = vld [vmem:[#allocation3 + $0x14] sm:$0xf]
    %v303 = vld [vmem:[#allocation3 + $0x18] sm:$0xf]
    %v304 = vld [vmem:[#allocation3 + $0x1c] sm:$0xf]
    %v305 = vld [vmem:[#allocation3 + $0x20] sm:$0xf]
    %v306 = vld [vmem:[#allocation3 + $0x24] sm:$0xf]
    %v307 = vld [vmem:[%s4] sm:$0xf]
    %v308 = vld [vmem:[%s4 + $0x4] sm:$0xf]
    %v309 = vld [vmem:[%s4 + $0x8] sm:$0xf]
    %v310 = vld [vmem:[%s4 + $0xc] sm:$0xf]
    %v311 = vld [vmem:[%s4 + $0x10] sm:$0xf]
    %v312 = vld [vmem:[%s4 + $0x14] sm:$0xf]
    %v313 = vld [vmem:[%s4 + $0x18] sm:$0xf]
    %v314 = vld [vmem:[%s4 + $0x1c] sm:$0xf]
    %v315 = vld [vmem:[%s4 + $0x20] sm:$0xf]
    %v316 = vld [vmem:[%s4 + $0x24] sm:$0xf]
    %v317 = vld [vmem:[%s4 + $0x28] sm:$0xf]
    %v318 = vld [vmem:[%s4 + $0x2c] sm:$0xf]
    %v319 = vld [vmem:[%s4 + $0x30] sm:$0xf]
    %v320 = vld [vmem:[%s4 + $0x34] sm:$0xf]
    %v321 = vld [vmem:[%s4 + $0x38] sm:$0xf]
    %v322 = vld [vmem:[%s4 + $0x3c] sm:$0xf]
    %v323 = vld [vmem:[#allocation11] ss:$0 sm:$0xff]
    %v334 = vunpack.c.l.b16 %v297
    %v335 = vunpack.c.l.b16 %v298
    %v336 = vunpack.c.l.b16 %v299
    %v337 = vunpack.c.l.b16 %v300
    %v338 = vunpack.c.l.b16 %v301
    %v339 = vunpack.c.l.b16 %v302
    %v340 = vunpack.c.l.b16 %v303
    %v341 = vunpack.c.l.b16 %v304
    %v342 = vunpack.c.l.b16 %v305
    %v343 = vunpack.c.l.b16 %v306
    %v344 = vpack.c.b16 %v335, %v334
    %v345 = vpack.c.b16 %v337, %v336
    %v346 = vpack.c.b16 %v339, %v338
    %v347 = vpack.c.b16 %v341, %v340
    %v348 = vpack.c.b16 %v343, %v342
    %v370 = vunpack.c.l.b16 %v307
    %v371 = vunpack.c.l.b16 %v308
    %v372 = vunpack.c.l.b16 %v309
    %v373 = vunpack.c.l.b16 %v310
    %v374 = vunpack.c.l.b16 %v311
    %v375 = vunpack.c.l.b16 %v312
    %v376 = vunpack.c.l.b16 %v313
    %v377 = vunpack.c.l.b16 %v314
    %v378 = vunpack.c.l.b16 %v315
    %v379 = vunpack.c.l.b16 %v316
    %v380 = vunpack.c.l.b16 %v317
    %v381 = vunpack.c.l.b16 %v318
    %v382 = vunpack.c.l.b16 %v319
    %v383 = vunpack.c.l.b16 %v320
    %v384 = vunpack.c.l.b16 %v321
    %v385 = vunpack.c.l.b16 %v322
    %v386 = vpack.c.b16 %v371, %v370
    %v387 = vpack.c.b16 %v373, %v372
    %v388 = vpack.c.b16 %v375, %v374
    %v389 = vpack.c.b16 %v377, %v376
    %v390 = vpack.c.b16 %v379, %v378
    %v391 = vpack.c.b16 %v381, %v380
    %v392 = vpack.c.b16 %v383, %v382
    %v393 = vpack.c.b16 %v385, %v384
    %402 = vmatpush.bf16.msra.mxu0 %v393
    %403 = vmatpush.bf16.msra.mxu0 %v392
    %404 = vmatpush.bf16.msra.mxu0 %v391
    %405 = vmatpush.bf16.msra.mxu0 %v390
    %406 = vmatpush.bf16.msra.mxu0 %v389
    %407 = vmatpush.bf16.msra.mxu0 %v388
    %408 = vmatpush.bf16.msra.mxu0 %v387
    %409 = vmatpush.bf16.msra.mxu0 %v386
    %410 = vmatmul.bf16.gmra.mxu0 %v344
    %v411 = vpop.f32.mrf.mxu0
    %v412 = vadd.f32 %v323, %v411
    %v413 = vpop.f32.mrf.mxu0
    %v414 = vadd.f32 %v323, %v413
    %415 = vmatmul.bf16.gmra.mxu0 %v345
    %v416 = vpop.f32.mrf.mxu0
    %v417 = vadd.f32 %v323, %v416
    %v418 = vpop.f32.mrf.mxu0
    %v419 = vadd.f32 %v323, %v418
    %420 = vmatmul.bf16.gmra.mxu0 %v346
    %v421 = vpop.f32.mrf.mxu0
    %v422 = vadd.f32 %v323, %v421
    %v423 = vpop.f32.mrf.mxu0
    %v424 = vadd.f32 %v323, %v423
    %425 = vmatmul.bf16.gmra.mxu0 %v347
    %v426 = vpop.f32.mrf.mxu0
    %v427 = vadd.f32 %v323, %v426
    %v428 = vpop.f32.mrf.mxu0
    %v429 = vadd.f32 %v323, %v428
    %430 = vmatmul.bf16.gmra.mxu0 %v348
    %v431 = vpop.f32.mrf.mxu0
    %v432 = vadd.f32 %v323, %v431
    %v433 = vpop.f32.mrf.mxu0
    %v434 = vadd.f32 %v323, %v433
    %435 = vdwg.mxu0
    %v436 = vmax.f32 %v412, 0.0
    %v437 = vmax.f32 %v414, 0.0
    %v438 = vmax.f32 %v417, 0.0
    %v439 = vmax.f32 %v419, 0.0
    %v440 = vmax.f32 %v422, 0.0
    %v441 = vmax.f32 %v424, 0.0
    %v442 = vmax.f32 %v427, 0.0
    %v443 = vmax.f32 %v429, 0.0
    %v444 = vmax.f32 %v432, 0.0
    %v445 = vmax.f32 %v434, 0.0
    %v446 = vmul.f32 %v436, %v287
    %v447 = vmul.f32 %v437, %v288
    %v448 = vmul.f32 %v438, %v289
    %v449 = vmul.f32 %v439, %v290
    %v450 = vmul.f32 %v440, %v291
    %v451 = vmul.f32 %v441, %v292
    %v452 = vmul.f32 %v442, %v293
    %v453 = vmul.f32 %v443, %v294
    %v454 = vmul.f32 %v444, %v295
    %v455 = vmul.f32 %v445, %v296
    %v456 = vld [vmem:[#allocation11 + $0x1] ss:$0 sm:$0xff]
    %vm457 = vcmask 523264
    %458 = vst.msk [vmem:[#allocation2 + $0x8] sm:$0xff] %vm457, %v446
    %459 = vst.msk [vmem:[#allocation2 + $0x10] sm:$0xff] %vm457, %v447
    %460 = vst.msk [vmem:[#allocation2 + $0x18] sm:$0xff] %vm457, %v448
    %461 = vst.msk [vmem:[#allocation2 + $0x20] sm:$0xff] %vm457, %v449
    %462 = vst.msk [vmem:[#allocation2 + $0x28] sm:$0xff] %vm457, %v450
    %463 = vst.msk [vmem:[#allocation2 + $0x30] sm:$0xff] %vm457, %v451
    %464 = vst.msk [vmem:[#allocation2 + $0x38] sm:$0xff] %vm457, %v452
    %465 = vst.msk [vmem:[#allocation2 + $0x40] sm:$0xff] %vm457, %v453
    %466 = vst.msk [vmem:[#allocation2 + $0x48] sm:$0xff] %vm457, %v454
    %467 = vst.msk [vmem:[#allocation2 + $0x50] sm:$0xff] %vm457, %v455
    %v468 = vld [vmem:[#allocation2 + $0x7] sm:$0xff]
    %v469 = vld [vmem:[#allocation2 + $0xf] sm:$0xff]
    %v470 = vld [vmem:[#allocation2 + $0x17] sm:$0xff]
    %v471 = vld [vmem:[#allocation2 + $0x1f] sm:$0xff]
    %v472 = vld [vmem:[#allocation2 + $0x27] sm:$0xff]
    %v473 = vld [vmem:[#allocation2 + $0x2f] sm:$0xff]
    %v474 = vld [vmem:[#allocation2 + $0x37] sm:$0xff]
    %v475 = vld [vmem:[#allocation2 + $0x3f] sm:$0xff]
    %v476 = vld [vmem:[#allocation2 + $0x47] sm:$0xff]
    %v477 = vld [vmem:[#allocation2 + $0x4f] sm:$0xff]
    %v478 = vld [vmem:[%s1] sm:$0xf]
    %v479 = vld [vmem:[%s1 + $0x4] sm:$0xf]
    %v480 = vld [vmem:[%s1 + $0x8] sm:$0xf]
    %v481 = vld [vmem:[%s1 + $0xc] sm:$0xf]
    %v482 = vld [vmem:[%s1 + $0x10] sm:$0xf]
    %v483 = vld [vmem:[%s1 + $0x14] sm:$0xf]
    %v484 = vld [vmem:[%s1 + $0x18] sm:$0xf]
    %v485 = vld [vmem:[%s1 + $0x1c] sm:$0xf]
    %v486 = vpack.c.bf16 %v469, %v468
    %v487 = vpack.c.bf16 %v471, %v470
    %v488 = vpack.c.bf16 %v473, %v472
    %v489 = vpack.c.bf16 %v475, %v474
    %v490 = vpack.c.bf16 %v477, %v476
    %v491 = vld [vmem:[#allocation2 + $0x8] sm:$0xff]
    %v492 = vld [vmem:[#allocation2 + $0x10] sm:$0xff]
    %v493 = vld [vmem:[#allocation2 + $0x18] sm:$0xff]
    %v494 = vld [vmem:[#allocation2 + $0x20] sm:$0xff]
    %v495 = vld [vmem:[#allocation2 + $0x28] sm:$0xff]
    %v496 = vld [vmem:[#allocation2 + $0x30] sm:$0xff]
    %v497 = vld [vmem:[#allocation2 + $0x38] sm:$0xff]
    %v498 = vld [vmem:[#allocation2 + $0x40] sm:$0xff]
    %v499 = vld [vmem:[#allocation2 + $0x48] sm:$0xff]
    %v500 = vld [vmem:[#allocation2 + $0x50] sm:$0xff]
    %s501 = scalar_lea.vmem %s1, 32
    %v502 = vld [vmem:[%s501] sm:$0xf]
    %v503 = vld [vmem:[%s501 + $0x4] sm:$0xf]
    %v504 = vld [vmem:[%s501 + $0x8] sm:$0xf]
    %v505 = vld [vmem:[%s501 + $0xc] sm:$0xf]
    %v506 = vld [vmem:[%s501 + $0x10] sm:$0xf]
    %v507 = vld [vmem:[%s501 + $0x14] sm:$0xf]
    %v508 = vld [vmem:[%s501 + $0x18] sm:$0xf]
    %v509 = vld [vmem:[%s501 + $0x1c] sm:$0xf]
    %v510 = vpack.c.bf16 %v492, %v491
    %v511 = vpack.c.bf16 %v494, %v493
    %v512 = vpack.c.bf16 %v496, %v495
    %v513 = vpack.c.bf16 %v498, %v497
    %v514 = vpack.c.bf16 %v500, %v499
    %v523 = vunpack.c.l.b16 %v502
    %v524 = vunpack.c.l.b16 %v503
    %v525 = vunpack.c.l.b16 %v504
    %v526 = vunpack.c.l.b16 %v505
    %v527 = vunpack.c.l.b16 %v506
    %v528 = vunpack.c.l.b16 %v507
    %v529 = vunpack.c.l.b16 %v508
    %v530 = vunpack.c.l.b16 %v509
    %v531 = vpack.c.b16 %v524, %v523
    %v532 = vpack.c.b16 %v526, %v525
    %v533 = vpack.c.b16 %v528, %v527
    %v534 = vpack.c.b16 %v530, %v529
    %v540 = vsel %vm457, %v510, 0
    %v543 = vsel %vm457, %v511, 0
    %v546 = vsel %vm457, %v512, 0
    %v549 = vsel %vm457, %v513, 0
    %v552 = vsel %vm457, %v514, 0
    %554 = vmatpush.bf16.msra.mxu0 0
    %555 = vmatpush.bf16.msra.mxu0 0
    %556 = vmatpush.bf16.msra.mxu0 0
    %557 = vmatpush.bf16.msra.mxu0 0
    %558 = vmatpush.bf16.msra.mxu0 %v534
    %559 = vmatpush.bf16.msra.mxu0 %v533
    %560 = vmatpush.bf16.msra.mxu0 %v532
    %561 = vmatpush.bf16.msra.mxu0 %v531
    %562 = vmatmul.bf16.gmra.mxu0 %v540
    %v563 = vpop.f32.mrf.mxu0
    %v564 = vadd.f32 0.0, %v563
    %v565 = vpop.f32.mrf.mxu0
    %v566 = vadd.f32 0.0, %v565
    %567 = vmatmul.bf16.gmra.mxu0 %v543
    %v568 = vpop.f32.mrf.mxu0
    %v569 = vadd.f32 0.0, %v568
    %v570 = vpop.f32.mrf.mxu0
    %v571 = vadd.f32 0.0, %v570
    %572 = vmatmul.bf16.gmra.mxu0 %v546
    %v573 = vpop.f32.mrf.mxu0
    %v574 = vadd.f32 0.0, %v573
    %v575 = vpop.f32.mrf.mxu0
    %v576 = vadd.f32 0.0, %v575
    %577 = vmatmul.bf16.gmra.mxu0 %v549
    %v578 = vpop.f32.mrf.mxu0
    %v579 = vadd.f32 0.0, %v578
    %v580 = vpop.f32.mrf.mxu0
    %v581 = vadd.f32 0.0, %v580
    %582 = vmatmul.bf16.gmra.mxu0 %v552
    %v583 = vpop.f32.mrf.mxu0
    %v584 = vadd.f32 0.0, %v583
    %v585 = vpop.f32.mrf.mxu0
    %v586 = vadd.f32 0.0, %v585
    %587 = vdwg.mxu0
    %v596 = vunpack.c.l.b16 %v478
    %v597 = vunpack.c.l.b16 %v479
    %v598 = vunpack.c.l.b16 %v480
    %v599 = vunpack.c.l.b16 %v481
    %v600 = vunpack.c.l.b16 %v482
    %v601 = vunpack.c.l.b16 %v483
    %v602 = vunpack.c.l.b16 %v484
    %v603 = vunpack.c.l.b16 %v485
    %v604 = vpack.c.b16 %v597, %v596
    %v605 = vpack.c.b16 %v599, %v598
    %v606 = vpack.c.b16 %v601, %v600
    %v607 = vpack.c.b16 %v603, %v602
    %v613 = vsel %vm457, %v486, 0
    %v616 = vsel %vm457, %v487, 0
    %v619 = vsel %vm457, %v488, 0
    %v622 = vsel %vm457, %v489, 0
    %v625 = vsel %vm457, %v490, 0
    %627 = vmatpush.bf16.msra.mxu0 0
    %628 = vmatpush.bf16.msra.mxu0 0
    %629 = vmatpush.bf16.msra.mxu0 0
    %630 = vmatpush.bf16.msra.mxu0 0
    %631 = vmatpush.bf16.msra.mxu0 %v607
    %632 = vmatpush.bf16.msra.mxu0 %v606
    %633 = vmatpush.bf16.msra.mxu0 %v605
    %634 = vmatpush.bf16.msra.mxu0 %v604
    %635 = vmatmul.bf16.gmra.mxu0 %v613
    %v636 = vpop.f32.mrf.mxu0
    %v637 = vadd.f32 %v564, %v636
    %v638 = vpop.f32.mrf.mxu0
    %v639 = vadd.f32 %v566, %v638
    %640 = vmatmul.bf16.gmra.mxu0 %v616
    %v641 = vpop.f32.mrf.mxu0
    %v642 = vadd.f32 %v569, %v641
    %v643 = vpop.f32.mrf.mxu0
    %v644 = vadd.f32 %v571, %v643
    %645 = vmatmul.bf16.gmra.mxu0 %v619
    %v646 = vpop.f32.mrf.mxu0
    %v647 = vadd.f32 %v574, %v646
    %v648 = vpop.f32.mrf.mxu0
    %v649 = vadd.f32 %v576, %v648
    %650 = vmatmul.bf16.gmra.mxu0 %v622
    %v651 = vpop.f32.mrf.mxu0
    %v652 = vadd.f32 %v579, %v651
    %v653 = vpop.f32.mrf.mxu0
    %v654 = vadd.f32 %v581, %v653
    %655 = vmatmul.bf16.gmra.mxu0 %v625
    %v656 = vpop.f32.mrf.mxu0
    %v657 = vadd.f32 %v584, %v656
    %v658 = vpop.f32.mrf.mxu0
    %v659 = vadd.f32 %v586, %v658
    %660 = vdwg.mxu0
    %v661 = vld [vmem:[#allocation2 + $0x9] sm:$0xff]
    %v662 = vld [vmem:[#allocation2 + $0x11] sm:$0xff]
    %v663 = vld [vmem:[#allocation2 + $0x19] sm:$0xff]
    %v664 = vld [vmem:[#allocation2 + $0x21] sm:$0xff]
    %v665 = vld [vmem:[#allocation2 + $0x29] sm:$0xff]
    %v666 = vld [vmem:[#allocation2 + $0x31] sm:$0xff]
    %v667 = vld [vmem:[#allocation2 + $0x39] sm:$0xff]
    %v668 = vld [vmem:[#allocation2 + $0x41] sm:$0xff]
    %v669 = vld [vmem:[#allocation2 + $0x49] sm:$0xff]
    %v670 = vld [vmem:[#allocation2 + $0x51] sm:$0xff]
    %s671 = scalar_lea.vmem %s1, 64
    %v672 = vld [vmem:[%s671] sm:$0xf]
    %v673 = vld [vmem:[%s671 + $0x4] sm:$0xf]
    %v674 = vld [vmem:[%s671 + $0x8] sm:$0xf]
    %v675 = vld [vmem:[%s671 + $0xc] sm:$0xf]
    %v676 = vld [vmem:[%s671 + $0x10] sm:$0xf]
    %v677 = vld [vmem:[%s671 + $0x14] sm:$0xf]
    %v678 = vld [vmem:[%s671 + $0x18] sm:$0xf]
    %v679 = vld [vmem:[%s671 + $0x1c] sm:$0xf]
    %v680 = vpack.c.bf16 %v662, %v661
    %v681 = vpack.c.bf16 %v664, %v663
    %v682 = vpack.c.bf16 %v666, %v665
    %v683 = vpack.c.bf16 %v668, %v667
    %v684 = vpack.c.bf16 %v670, %v669
    %v693 = vunpack.c.l.b16 %v672
    %v694 = vunpack.c.l.b16 %v673
    %v695 = vunpack.c.l.b16 %v674
    %v696 = vunpack.c.l.b16 %v675
    %v697 = vunpack.c.l.b16 %v676
    %v698 = vunpack.c.l.b16 %v677
    %v699 = vunpack.c.l.b16 %v678
    %v700 = vunpack.c.l.b16 %v679
    %v701 = vpack.c.b16 %v694, %v693
    %v702 = vpack.c.b16 %v696, %v695
    %v703 = vpack.c.b16 %v698, %v697
    %v704 = vpack.c.b16 %v700, %v699
    %v710 = vsel %vm457, %v680, 0
    %v713 = vsel %vm457, %v681, 0
    %v716 = vsel %vm457, %v682, 0
    %v719 = vsel %vm457, %v683, 0
    %v722 = vsel %vm457, %v684, 0
    %724 = vmatpush.bf16.msra.mxu0 0
    %725 = vmatpush.bf16.msra.mxu0 0
    %726 = vmatpush.bf16.msra.mxu0 0
    %727 = vmatpush.bf16.msra.mxu0 0
    %728 = vmatpush.bf16.msra.mxu0 %v704
    %729 = vmatpush.bf16.msra.mxu0 %v703
    %730 = vmatpush.bf16.msra.mxu0 %v702
    %731 = vmatpush.bf16.msra.mxu0 %v701
    %732 = vmatmul.bf16.gmra.mxu0 %v710
    %v733 = vpop.f32.mrf.mxu0
    %v734 = vadd.f32 0.0, %v733
    %v735 = vpop.f32.mrf.mxu0
    %v736 = vadd.f32 0.0, %v735
    %737 = vmatmul.bf16.gmra.mxu0 %v713
    %v738 = vpop.f32.mrf.mxu0
    %v739 = vadd.f32 0.0, %v738
    %v740 = vpop.f32.mrf.mxu0
    %v741 = vadd.f32 0.0, %v740
    %742 = vmatmul.bf16.gmra.mxu0 %v716
    %v743 = vpop.f32.mrf.mxu0
    %v744 = vadd.f32 0.0, %v743
    %v745 = vpop.f32.mrf.mxu0
    %v746 = vadd.f32 0.0, %v745
    %747 = vmatmul.bf16.gmra.mxu0 %v719
    %v748 = vpop.f32.mrf.mxu0
    %v749 = vadd.f32 0.0, %v748
    %v750 = vpop.f32.mrf.mxu0
    %v751 = vadd.f32 0.0, %v750
    %752 = vmatmul.bf16.gmra.mxu0 %v722
    %v753 = vpop.f32.mrf.mxu0
    %v754 = vadd.f32 0.0, %v753
    %v755 = vpop.f32.mrf.mxu0
    %v756 = vadd.f32 0.0, %v755
    %757 = vdwg.mxu0
    %v758 = vadd.f32 %v637, %v734
    %v759 = vadd.f32 %v639, %v736
    %v760 = vadd.f32 %v642, %v739
    %v761 = vadd.f32 %v644, %v741
    %v762 = vadd.f32 %v647, %v744
    %v763 = vadd.f32 %v649, %v746
    %v764 = vadd.f32 %v652, %v749
    %v765 = vadd.f32 %v654, %v751
    %v766 = vadd.f32 %v657, %v754
    %v767 = vadd.f32 %v659, %v756
    %v768 = vadd.f32 %v758, %v456
    %v769 = vadd.f32 %v759, %v456
    %v770 = vadd.f32 %v760, %v456
    %v771 = vadd.f32 %v761, %v456
    %v772 = vadd.f32 %v762, %v456
    %v773 = vadd.f32 %v763, %v456
    %v774 = vadd.f32 %v764, %v456
    %v775 = vadd.f32 %v765, %v456
    %v776 = vadd.f32 %v766, %v456
    %v777 = vadd.f32 %v767, %v456
    %v778 = vmax.f32 %v768, 0.0
    %v779 = vmax.f32 %v769, 0.0
    %v780 = vmax.f32 %v770, 0.0
    %v781 = vmax.f32 %v771, 0.0
    %v782 = vmax.f32 %v772, 0.0
    %v783 = vmax.f32 %v773, 0.0
    %v784 = vmax.f32 %v774, 0.0
    %v785 = vmax.f32 %v775, 0.0
    %v786 = vmax.f32 %v776, 0.0
    %v787 = vmax.f32 %v777, 0.0
    %v788 = vmul.f32 %v778, %v287
    %v789 = vmul.f32 %v779, %v288
    %v790 = vmul.f32 %v780, %v289
    %v791 = vmul.f32 %v781, %v290
    %v792 = vmul.f32 %v782, %v291
    %v793 = vmul.f32 %v783, %v292
    %v794 = vmul.f32 %v784, %v293
    %v795 = vmul.f32 %v785, %v294
    %v796 = vmul.f32 %v786, %v295
    %v797 = vmul.f32 %v787, %v296
    %v798 = vld [vmem:[#allocation11 + $0x2] ss:$0 sm:$0xff]
    %799 = vst [vmem:[#allocation2 + $0x8] sm:$0xff] %v788
    %800 = vst [vmem:[#allocation2 + $0x10] sm:$0xff] %v789
    %801 = vst [vmem:[#allocation2 + $0x18] sm:$0xff] %v790
    %802 = vst [vmem:[#allocation2 + $0x20] sm:$0xff] %v791
    %803 = vst [vmem:[#allocation2 + $0x28] sm:$0xff] %v792
    %804 = vst [vmem:[#allocation2 + $0x30] sm:$0xff] %v793
    %805 = vst [vmem:[#allocation2 + $0x38] sm:$0xff] %v794
    %806 = vst [vmem:[#allocation2 + $0x40] sm:$0xff] %v795
    %807 = vst [vmem:[#allocation2 + $0x48] sm:$0xff] %v796
    %808 = vst [vmem:[#allocation2 + $0x50] sm:$0xff] %v797
    %v809 = vld [vmem:[#allocation2 + $0x7] sm:$0xff]
    %v810 = vld [vmem:[#allocation2 + $0xf] sm:$0xff]
    %v811 = vld [vmem:[#allocation2 + $0x17] sm:$0xff]
    %v812 = vld [vmem:[#allocation2 + $0x1f] sm:$0xff]
    %v813 = vld [vmem:[#allocation2 + $0x27] sm:$0xff]
    %v814 = vld [vmem:[#allocation2 + $0x2f] sm:$0xff]
    %v815 = vld [vmem:[#allocation2 + $0x37] sm:$0xff]
    %v816 = vld [vmem:[#allocation2 + $0x3f] sm:$0xff]
    %v817 = vld [vmem:[#allocation2 + $0x47] sm:$0xff]
    %v818 = vld [vmem:[#allocation2 + $0x4f] sm:$0xff]
    %v819 = vld [vmem:[#allocation6] sm:$0xf]
    %v820 = vld [vmem:[#allocation6 + $0x4] sm:$0xf]
    %v821 = vld [vmem:[#allocation6 + $0x8] sm:$0xf]
    %v822 = vld [vmem:[#allocation6 + $0xc] sm:$0xf]
    %v823 = vld [vmem:[#allocation6 + $0x10] sm:$0xf]
    %v824 = vld [vmem:[#allocation6 + $0x14] sm:$0xf]
    %v825 = vld [vmem:[#allocation6 + $0x18] sm:$0xf]
    %v826 = vld [vmem:[#allocation6 + $0x1c] sm:$0xf]
    %v827 = vld [vmem:[#allocation6 + $0x20] sm:$0xf]
    %v828 = vld [vmem:[#allocation6 + $0x24] sm:$0xf]
    %v829 = vld [vmem:[#allocation6 + $0x28] sm:$0xf]
    %v830 = vld [vmem:[#allocation6 + $0x2c] sm:$0xf]
    %v831 = vld [vmem:[#allocation6 + $0x30] sm:$0xf]
    %v832 = vld [vmem:[#allocation6 + $0x34] sm:$0xf]
    %v833 = vld [vmem:[#allocation6 + $0x38] sm:$0xf]
    %v834 = vld [vmem:[#allocation6 + $0x3c] sm:$0xf]
    %v835 = vpack.c.bf16 %v810, %v809
    %v836 = vpack.c.bf16 %v812, %v811
    %v837 = vpack.c.bf16 %v814, %v813
    %v838 = vpack.c.bf16 %v816, %v815
    %v839 = vpack.c.bf16 %v818, %v817
    %v840 = vld [vmem:[#allocation2 + $0x8] sm:$0xff]
    %v841 = vld [vmem:[#allocation2 + $0x10] sm:$0xff]
    %v842 = vld [vmem:[#allocation2 + $0x18] sm:$0xff]
    %v843 = vld [vmem:[#allocation2 + $0x20] sm:$0xff]
    %v844 = vld [vmem:[#allocation2 + $0x28] sm:$0xff]
    %v845 = vld [vmem:[#allocation2 + $0x30] sm:$0xff]
    %v846 = vld [vmem:[#allocation2 + $0x38] sm:$0xff]
    %v847 = vld [vmem:[#allocation2 + $0x40] sm:$0xff]
    %v848 = vld [vmem:[#allocation2 + $0x48] sm:$0xff]
    %v849 = vld [vmem:[#allocation2 + $0x50] sm:$0xff]
    %s850 = scalar_lea.vmem [#allocation6], 64
    %v851 = vld [vmem:[%s850] sm:$0xf]
    %v852 = vld [vmem:[%s850 + $0x4] sm:$0xf]
    %v853 = vld [vmem:[%s850 + $0x8] sm:$0xf]
    %v854 = vld [vmem:[%s850 + $0xc] sm:$0xf]
    %v855 = vld [vmem:[%s850 + $0x10] sm:$0xf]
    %v856 = vld [vmem:[%s850 + $0x14] sm:$0xf]
    %v857 = vld [vmem:[%s850 + $0x18] sm:$0xf]
    %v858 = vld [vmem:[%s850 + $0x1c] sm:$0xf]
    %v859 = vld [vmem:[%s850 + $0x20] sm:$0xf]
    %v860 = vld [vmem:[%s850 + $0x24] sm:$0xf]
    %v861 = vld [vmem:[%s850 + $0x28] sm:$0xf]
    %v862 = vld [vmem:[%s850 + $0x2c] sm:$0xf]
    %v863 = vld [vmem:[%s850 + $0x30] sm:$0xf]
    %v864 = vld [vmem:[%s850 + $0x34] sm:$0xf]
    %v865 = vld [vmem:[%s850 + $0x38] sm:$0xf]
    %v866 = vld [vmem:[%s850 + $0x3c] sm:$0xf]
    %v867 = vpack.c.bf16 %v841, %v840
    %v868 = vpack.c.bf16 %v843, %v842
    %v869 = vpack.c.bf16 %v845, %v844
    %v870 = vpack.c.bf16 %v847, %v846
    %v871 = vpack.c.bf16 %v849, %v848
    %v888 = vunpack.c.l.b16 %v851
    %v889 = vunpack.c.l.b16 %v852
    %v890 = vunpack.c.l.b16 %v853
    %v891 = vunpack.c.l.b16 %v854
    %v892 = vunpack.c.l.b16 %v855
    %v893 = vunpack.c.l.b16 %v856
    %v894 = vunpack.c.l.b16 %v857
    %v895 = vunpack.c.l.b16 %v858
    %v896 = vunpack.c.l.b16 %v859
    %v897 = vunpack.c.l.b16 %v860
    %v898 = vunpack.c.l.b16 %v861
    %v899 = vunpack.c.l.b16 %v862
    %v900 = vunpack.c.l.b16 %v863
    %v901 = vunpack.c.l.b16 %v864
    %v902 = vunpack.c.l.b16 %v865
    %v903 = vunpack.c.l.b16 %v866
    %v904 = vpack.c.b16 %v889, %v888
    %v905 = vpack.c.b16 %v891, %v890
    %v906 = vpack.c.b16 %v893, %v892
    %v907 = vpack.c.b16 %v895, %v894
    %v908 = vpack.c.b16 %v897, %v896
    %v909 = vpack.c.b16 %v899, %v898
    %v910 = vpack.c.b16 %v901, %v900
    %v911 = vpack.c.b16 %v903, %v902
    %920 = vmatpush.bf16.msra.mxu0 %v911
    %921 = vmatpush.bf16.msra.mxu0 %v910
    %922 = vmatpush.bf16.msra.mxu0 %v909
    %923 = vmatpush.bf16.msra.mxu0 %v908
    %924 = vmatpush.bf16.msra.mxu0 %v907
    %925 = vmatpush.bf16.msra.mxu0 %v906
    %926 = vmatpush.bf16.msra.mxu0 %v905
    %927 = vmatpush.bf16.msra.mxu0 %v904
    %928 = vmatmul.bf16.gmra.mxu0 %v867
    %v929 = vpop.f32.mrf.mxu0
    %v930 = vadd.f32 0.0, %v929
    %v931 = vpop.f32.mrf.mxu0
    %v932 = vadd.f32 0.0, %v931
    %933 = vmatmul.bf16.gmra.mxu0 %v868
    %v934 = vpop.f32.mrf.mxu0
    %v935 = vadd.f32 0.0, %v934
    %v936 = vpop.f32.mrf.mxu0
    %v937 = vadd.f32 0.0, %v936
    %938 = vmatmul.bf16.gmra.mxu0 %v869
    %v939 = vpop.f32.mrf.mxu0
    %v940 = vadd.f32 0.0, %v939
    %v941 = vpop.f32.mrf.mxu0
    %v942 = vadd.f32 0.0, %v941
    %943 = vmatmul.bf16.gmra.mxu0 %v870
    %v944 = vpop.f32.mrf.mxu0
    %v945 = vadd.f32 0.0, %v944
    %v946 = vpop.f32.mrf.mxu0
    %v947 = vadd.f32 0.0, %v946
    %948 = vmatmul.bf16.gmra.mxu0 %v871
    %v949 = vpop.f32.mrf.mxu0
    %v950 = vadd.f32 0.0, %v949
    %v951 = vpop.f32.mrf.mxu0
    %v952 = vadd.f32 0.0, %v951
    %953 = vdwg.mxu0
    %v970 = vunpack.c.l.b16 %v819
    %v971 = vunpack.c.l.b16 %v820
    %v972 = vunpack.c.l.b16 %v821
    %v973 = vunpack.c.l.b16 %v822
    %v974 = vunpack.c.l.b16 %v823
    %v975 = vunpack.c.l.b16 %v824
    %v976 = vunpack.c.l.b16 %v825
    %v977 = vunpack.c.l.b16 %v826
    %v978 = vunpack.c.l.b16 %v827
    %v979 = vunpack.c.l.b16 %v828
    %v980 = vunpack.c.l.b16 %v829
    %v981 = vunpack.c.l.b16 %v830
    %v982 = vunpack.c.l.b16 %v831
    %v983 = vunpack.c.l.b16 %v832
    %v984 = vunpack.c.l.b16 %v833
    %v985 = vunpack.c.l.b16 %v834
    %v986 = vpack.c.b16 %v971, %v970
    %v987 = vpack.c.b16 %v973, %v972
    %v988 = vpack.c.b16 %v975, %v974
    %v989 = vpack.c.b16 %v977, %v976
    %v990 = vpack.c.b16 %v979, %v978
    %v991 = vpack.c.b16 %v981, %v980
    %v992 = vpack.c.b16 %v983, %v982
    %v993 = vpack.c.b16 %v985, %v984
    %1002 = vmatpush.bf16.msra.mxu0 %v993
    %1003 = vmatpush.bf16.msra.mxu0 %v992
    %1004 = vmatpush.bf16.msra.mxu0 %v991
    %1005 = vmatpush.bf16.msra.mxu0 %v990
    %1006 = vmatpush.bf16.msra.mxu0 %v989
    %1007 = vmatpush.bf16.msra.mxu0 %v988
    %1008 = vmatpush.bf16.msra.mxu0 %v987
    %1009 = vmatpush.bf16.msra.mxu0 %v986
    %1010 = vmatmul.bf16.gmra.mxu0 %v835
    %v1011 = vpop.f32.mrf.mxu0
    %v1012 = vadd.f32 %v930, %v1011
    %v1013 = vpop.f32.mrf.mxu0
    %v1014 = vadd.f32 %v932, %v1013
    %1015 = vmatmul.bf16.gmra.mxu0 %v836
    %v1016 = vpop.f32.mrf.mxu0
    %v1017 = vadd.f32 %v935, %v1016
    %v1018 = vpop.f32.mrf.mxu0
    %v1019 = vadd.f32 %v937, %v1018
    %1020 = vmatmul.bf16.gmra.mxu0 %v837
    %v1021 = vpop.f32.mrf.mxu0
    %v1022 = vadd.f32 %v940, %v1021
    %v1023 = vpop.f32.mrf.mxu0
    %v1024 = vadd.f32 %v942, %v1023
    %1025 = vmatmul.bf16.gmra.mxu0 %v838
    %v1026 = vpop.f32.mrf.mxu0
    %v1027 = vadd.f32 %v945, %v1026
    %v1028 = vpop.f32.mrf.mxu0
    %v1029 = vadd.f32 %v947, %v1028
    %1030 = vmatmul.bf16.gmra.mxu0 %v839
    %v1031 = vpop.f32.mrf.mxu0
    %v1032 = vadd.f32 %v950, %v1031
    %v1033 = vpop.f32.mrf.mxu0
    %v1034 = vadd.f32 %v952, %v1033
    %1035 = vdwg.mxu0
    %v1036 = vld [vmem:[#allocation2 + $0x9] sm:$0xff]
    %v1037 = vld [vmem:[#allocation2 + $0x11] sm:$0xff]
    %v1038 = vld [vmem:[#allocation2 + $0x19] sm:$0xff]
    %v1039 = vld [vmem:[#allocation2 + $0x21] sm:$0xff]
    %v1040 = vld [vmem:[#allocation2 + $0x29] sm:$0xff]
    %v1041 = vld [vmem:[#allocation2 + $0x31] sm:$0xff]
    %v1042 = vld [vmem:[#allocation2 + $0x39] sm:$0xff]
    %v1043 = vld [vmem:[#allocation2 + $0x41] sm:$0xff]
    %v1044 = vld [vmem:[#allocation2 + $0x49] sm:$0xff]
    %v1045 = vld [vmem:[#allocation2 + $0x51] sm:$0xff]
    %s1046 = scalar_lea.vmem [#allocation6], 128
    %v1047 = vld [vmem:[%s1046] sm:$0xf]
    %v1048 = vld [vmem:[%s1046 + $0x4] sm:$0xf]
    %v1049 = vld [vmem:[%s1046 + $0x8] sm:$0xf]
    %v1050 = vld [vmem:[%s1046 + $0xc] sm:$0xf]
    %v1051 = vld [vmem:[%s1046 + $0x10] sm:$0xf]
    %v1052 = vld [vmem:[%s1046 + $0x14] sm:$0xf]
    %v1053 = vld [vmem:[%s1046 + $0x18] sm:$0xf]
    %v1054 = vld [vmem:[%s1046 + $0x1c] sm:$0xf]
    %v1055 = vld [vmem:[%s1046 + $0x20] sm:$0xf]
    %v1056 = vld [vmem:[%s1046 + $0x24] sm:$0xf]
    %v1057 = vld [vmem:[%s1046 + $0x28] sm:$0xf]
    %v1058 = vld [vmem:[%s1046 + $0x2c] sm:$0xf]
    %v1059 = vld [vmem:[%s1046 + $0x30] sm:$0xf]
    %v1060 = vld [vmem:[%s1046 + $0x34] sm:$0xf]
    %v1061 = vld [vmem:[%s1046 + $0x38] sm:$0xf]
    %v1062 = vld [vmem:[%s1046 + $0x3c] sm:$0xf]
    %v1063 = vpack.c.bf16 %v1037, %v1036
    %v1064 = vpack.c.bf16 %v1039, %v1038
    %v1065 = vpack.c.bf16 %v1041, %v1040
    %v1066 = vpack.c.bf16 %v1043, %v1042
    %v1067 = vpack.c.bf16 %v1045, %v1044
    %v1084 = vunpack.c.l.b16 %v1047
    %v1085 = vunpack.c.l.b16 %v1048
    %v1086 = vunpack.c.l.b16 %v1049
    %v1087 = vunpack.c.l.b16 %v1050
    %v1088 = vunpack.c.l.b16 %v1051
    %v1089 = vunpack.c.l.b16 %v1052
    %v1090 = vunpack.c.l.b16 %v1053
    %v1091 = vunpack.c.l.b16 %v1054
    %v1092 = vunpack.c.l.b16 %v1055
    %v1093 = vunpack.c.l.b16 %v1056
    %v1094 = vunpack.c.l.b16 %v1057
    %v1095 = vunpack.c.l.b16 %v1058
    %v1096 = vunpack.c.l.b16 %v1059
    %v1097 = vunpack.c.l.b16 %v1060
    %v1098 = vunpack.c.l.b16 %v1061
    %v1099 = vunpack.c.l.b16 %v1062
    %v1100 = vpack.c.b16 %v1085, %v1084
    %v1101 = vpack.c.b16 %v1087, %v1086
    %v1102 = vpack.c.b16 %v1089, %v1088
    %v1103 = vpack.c.b16 %v1091, %v1090
    %v1104 = vpack.c.b16 %v1093, %v1092
    %v1105 = vpack.c.b16 %v1095, %v1094
    %v1106 = vpack.c.b16 %v1097, %v1096
    %v1107 = vpack.c.b16 %v1099, %v1098
    %1116 = vmatpush.bf16.msra.mxu0 %v1107
    %1117 = vmatpush.bf16.msra.mxu0 %v1106
    %1118 = vmatpush.bf16.msra.mxu0 %v1105
    %1119 = vmatpush.bf16.msra.mxu0 %v1104
    %1120 = vmatpush.bf16.msra.mxu0 %v1103
    %1121 = vmatpush.bf16.msra.mxu0 %v1102
    %1122 = vmatpush.bf16.msra.mxu0 %v1101
    %1123 = vmatpush.bf16.msra.mxu0 %v1100
    %1124 = vmatmul.bf16.gmra.mxu0 %v1063
    %v1125 = vpop.f32.mrf.mxu0
    %v1126 = vadd.f32 0.0, %v1125
    %v1127 = vpop.f32.mrf.mxu0
    %v1128 = vadd.f32 0.0, %v1127
    %1129 = vmatmul.bf16.gmra.mxu0 %v1064
    %v1130 = vpop.f32.mrf.mxu0
    %v1131 = vadd.f32 0.0, %v1130
    %v1132 = vpop.f32.mrf.mxu0
    %v1133 = vadd.f32 0.0, %v1132
    %1134 = vmatmul.bf16.gmra.mxu0 %v1065
    %v1135 = vpop.f32.mrf.mxu0
    %v1136 = vadd.f32 0.0, %v1135
    %v1137 = vpop.f32.mrf.mxu0
    %v1138 = vadd.f32 0.0, %v1137
    %1139 = vmatmul.bf16.gmra.mxu0 %v1066
    %v1140 = vpop.f32.mrf.mxu0
    %v1141 = vadd.f32 0.0, %v1140
    %v1142 = vpop.f32.mrf.mxu0
    %v1143 = vadd.f32 0.0, %v1142
    %1144 = vmatmul.bf16.gmra.mxu0 %v1067
    %v1145 = vpop.f32.mrf.mxu0
    %v1146 = vadd.f32 0.0, %v1145
    %v1147 = vpop.f32.mrf.mxu0
    %v1148 = vadd.f32 0.0, %v1147
    %1149 = vdwg.mxu0
    %v1150 = vadd.f32 %v1012, %v1126
    %v1151 = vadd.f32 %v1014, %v1128
    %v1152 = vadd.f32 %v1017, %v1131
    %v1153 = vadd.f32 %v1019, %v1133
    %v1154 = vadd.f32 %v1022, %v1136
    %v1155 = vadd.f32 %v1024, %v1138
    %v1156 = vadd.f32 %v1027, %v1141
    %v1157 = vadd.f32 %v1029, %v1143
    %v1158 = vadd.f32 %v1032, %v1146
    %v1159 = vadd.f32 %v1034, %v1148
    %v1160 = vadd.f32 %v1150, %v798
    %v1161 = vadd.f32 %v1151, %v798
    %v1162 = vadd.f32 %v1152, %v798
    %v1163 = vadd.f32 %v1153, %v798
    %v1164 = vadd.f32 %v1154, %v798
    %v1165 = vadd.f32 %v1155, %v798
    %v1166 = vadd.f32 %v1156, %v798
    %v1167 = vadd.f32 %v1157, %v798
    %v1168 = vadd.f32 %v1158, %v798
    %v1169 = vadd.f32 %v1159, %v798
    %v1170 = vmax.f32 %v1160, 0.0
    %v1171 = vmax.f32 %v1161, 0.0
    %v1172 = vmax.f32 %v1162, 0.0
    %v1173 = vmax.f32 %v1163, 0.0
    %v1174 = vmax.f32 %v1164, 0.0
    %v1175 = vmax.f32 %v1165, 0.0
    %v1176 = vmax.f32 %v1166, 0.0
    %v1177 = vmax.f32 %v1167, 0.0
    %v1178 = vmax.f32 %v1168, 0.0
    %v1179 = vmax.f32 %v1169, 0.0
    %v1180 = vmul.f32 %v1170, %v287
    %v1181 = vmul.f32 %v1171, %v288
    %v1182 = vmul.f32 %v1172, %v289
    %v1183 = vmul.f32 %v1173, %v290
    %v1184 = vmul.f32 %v1174, %v291
    %v1185 = vmul.f32 %v1175, %v292
    %v1186 = vmul.f32 %v1176, %v293
    %v1187 = vmul.f32 %v1177, %v294
    %v1188 = vmul.f32 %v1178, %v295
    %v1189 = vmul.f32 %v1179, %v296
    %v1190 = vadd.f32 %v788, %v1180
    %v1191 = vadd.f32 %v789, %v1181
    %v1192 = vadd.f32 %v790, %v1182
    %v1193 = vadd.f32 %v791, %v1183
    %v1194 = vadd.f32 %v792, %v1184
    %v1195 = vadd.f32 %v793, %v1185
    %v1196 = vadd.f32 %v794, %v1186
    %v1197 = vadd.f32 %v795, %v1187
    %v1198 = vadd.f32 %v796, %v1188
    %v1199 = vadd.f32 %v797, %v1189
    %v1200 = vld [vmem:[#allocation11 + $0x3] ss:$0 sm:$0xff]
    %1201 = vst [vmem:[#allocation2 + $0x8] sm:$0xff] %v1190
    %1202 = vst [vmem:[#allocation2 + $0x10] sm:$0xff] %v1191
    %1203 = vst [vmem:[#allocation2 + $0x18] sm:$0xff] %v1192
    %1204 = vst [vmem:[#allocation2 + $0x20] sm:$0xff] %v1193
    %1205 = vst [vmem:[#allocation2 + $0x28] sm:$0xff] %v1194
    %1206 = vst [vmem:[#allocation2 + $0x30] sm:$0xff] %v1195
    %1207 = vst [vmem:[#allocation2 + $0x38] sm:$0xff] %v1196
    %1208 = vst [vmem:[#allocation2 + $0x40] sm:$0xff] %v1197
    %1209 = vst [vmem:[#allocation2 + $0x48] sm:$0xff] %v1198
    %1210 = vst [vmem:[#allocation2 + $0x50] sm:$0xff] %v1199
    %v1211 = vld [vmem:[#allocation2 + $0x7] sm:$0xff]
    %v1212 = vld [vmem:[#allocation2 + $0xf] sm:$0xff]
    %v1213 = vld [vmem:[#allocation2 + $0x17] sm:$0xff]
    %v1214 = vld [vmem:[#allocation2 + $0x1f] sm:$0xff]
    %v1215 = vld [vmem:[#allocation2 + $0x27] sm:$0xff]
    %v1216 = vld [vmem:[#allocation2 + $0x2f] sm:$0xff]
    %v1217 = vld [vmem:[#allocation2 + $0x37] sm:$0xff]
    %v1218 = vld [vmem:[#allocation2 + $0x3f] sm:$0xff]
    %v1219 = vld [vmem:[#allocation2 + $0x47] sm:$0xff]
    %v1220 = vld [vmem:[#allocation2 + $0x4f] sm:$0xff]
    %s1221 = scalar_lea.vmem [#allocation6], 192
    %v1222 = vld [vmem:[%s1221] sm:$0xf]
    %v1223 = vld [vmem:[%s1221 + $0x4] sm:$0xf]
    %v1224 = vld [vmem:[%s1221 + $0x8] sm:$0xf]
    %v1225 = vld [vmem:[%s1221 + $0xc] sm:$0xf]
    %v1226 = vld [vmem:[%s1221 + $0x10] sm:$0xf]
    %v1227 = vld [vmem:[%s1221 + $0x14] sm:$0xf]
    %v1228 = vld [vmem:[%s1221 + $0x18] sm:$0xf]
    %v1229 = vld [vmem:[%s1221 + $0x1c] sm:$0xf]
    %v1230 = vld [vmem:[%s1221 + $0x20] sm:$0xf]
    %v1231 = vld [vmem:[%s1221 + $0x24] sm:$0xf]
    %v1232 = vld [vmem:[%s1221 + $0x28] sm:$0xf]
    %v1233 = vld [vmem:[%s1221 + $0x2c] sm:$0xf]
    %v1234 = vld [vmem:[%s1221 + $0x30] sm:$0xf]
    %v1235 = vld [vmem:[%s1221 + $0x34] sm:$0xf]
    %v1236 = vld [vmem:[%s1221 + $0x38] sm:$0xf]
    %v1237 = vld [vmem:[%s1221 + $0x3c] sm:$0xf]
    %v1238 = vpack.c.bf16 %v1212, %v1211
    %v1239 = vpack.c.bf16 %v1214, %v1213
    %v1240 = vpack.c.bf16 %v1216, %v1215
    %v1241 = vpack.c.bf16 %v1218, %v1217
    %v1242 = vpack.c.bf16 %v1220, %v1219
    %v1243 = vld [vmem:[#allocation2 + $0x8] sm:$0xff]
    %v1244 = vld [vmem:[#allocation2 + $0x10] sm:$0xff]
    %v1245 = vld [vmem:[#allocation2 + $0x18] sm:$0xff]
    %v1246 = vld [vmem:[#allocation2 + $0x20] sm:$0xff]
    %v1247 = vld [vmem:[#allocation2 + $0x28] sm:$0xff]
    %v1248 = vld [vmem:[#allocation2 + $0x30] sm:$0xff]
    %v1249 = vld [vmem:[#allocation2 + $0x38] sm:$0xff]
    %v1250 = vld [vmem:[#allocation2 + $0x40] sm:$0xff]
    %v1251 = vld [vmem:[#allocation2 + $0x48] sm:$0xff]
    %v1252 = vld [vmem:[#allocation2 + $0x50] sm:$0xff]
    %s1253 = scalar_lea.vmem [#allocation6], 256
    %v1254 = vld [vmem:[%s1253] sm:$0xf]
    %v1255 = vld [vmem:[%s1253 + $0x4] sm:$0xf]
    %v1256 = vld [vmem:[%s1253 + $0x8] sm:$0xf]
    %v1257 = vld [vmem:[%s1253 + $0xc] sm:$0xf]
    %v1258 = vld [vmem:[%s1253 + $0x10] sm:$0xf]
    %v1259 = vld [vmem:[%s1253 + $0x14] sm:$0xf]
    %v1260 = vld [vmem:[%s1253 + $0x18] sm:$0xf]
    %v1261 = vld [vmem:[%s1253 + $0x1c] sm:$0xf]
    %v1262 = vld [vmem:[%s1253 + $0x20] sm:$0xf]
    %v1263 = vld [vmem:[%s1253 + $0x24] sm:$0xf]
    %v1264 = vld [vmem:[%s1253 + $0x28] sm:$0xf]
    %v1265 = vld [vmem:[%s1253 + $0x2c] sm:$0xf]
    %v1266 = vld [vmem:[%s1253 + $0x30] sm:$0xf]
    %v1267 = vld [vmem:[%s1253 + $0x34] sm:$0xf]
    %v1268 = vld [vmem:[%s1253 + $0x38] sm:$0xf]
    %v1269 = vld [vmem:[%s1253 + $0x3c] sm:$0xf]
    %v1270 = vpack.c.bf16 %v1244, %v1243
    %v1271 = vpack.c.bf16 %v1246, %v1245
    %v1272 = vpack.c.bf16 %v1248, %v1247
    %v1273 = vpack.c.bf16 %v1250, %v1249
    %v1274 = vpack.c.bf16 %v1252, %v1251
    %v1291 = vunpack.c.l.b16 %v1254
    %v1292 = vunpack.c.l.b16 %v1255
    %v1293 = vunpack.c.l.b16 %v1256
    %v1294 = vunpack.c.l.b16 %v1257
    %v1295 = vunpack.c.l.b16 %v1258
    %v1296 = vunpack.c.l.b16 %v1259
    %v1297 = vunpack.c.l.b16 %v1260
    %v1298 = vunpack.c.l.b16 %v1261
    %v1299 = vunpack.c.l.b16 %v1262
    %v1300 = vunpack.c.l.b16 %v1263
    %v1301 = vunpack.c.l.b16 %v1264
    %v1302 = vunpack.c.l.b16 %v1265
    %v1303 = vunpack.c.l.b16 %v1266
    %v1304 = vunpack.c.l.b16 %v1267
    %v1305 = vunpack.c.l.b16 %v1268
    %v1306 = vunpack.c.l.b16 %v1269
    %v1307 = vpack.c.b16 %v1292, %v1291
    %v1308 = vpack.c.b16 %v1294, %v1293
    %v1309 = vpack.c.b16 %v1296, %v1295
    %v1310 = vpack.c.b16 %v1298, %v1297
    %v1311 = vpack.c.b16 %v1300, %v1299
    %v1312 = vpack.c.b16 %v1302, %v1301
    %v1313 = vpack.c.b16 %v1304, %v1303
    %v1314 = vpack.c.b16 %v1306, %v1305
    %1323 = vmatpush.bf16.msra.mxu0 %v1314
    %1324 = vmatpush.bf16.msra.mxu0 %v1313
    %1325 = vmatpush.bf16.msra.mxu0 %v1312
    %1326 = vmatpush.bf16.msra.mxu0 %v1311
    %1327 = vmatpush.bf16.msra.mxu0 %v1310
    %1328 = vmatpush.bf16.msra.mxu0 %v1309
    %1329 = vmatpush.bf16.msra.mxu0 %v1308
    %1330 = vmatpush.bf16.msra.mxu0 %v1307
    %1331 = vmatmul.bf16.gmra.mxu0 %v1270
    %v1332 = vpop.f32.mrf.mxu0
    %v1333 = vadd.f32 0.0, %v1332
    %v1334 = vpop.f32.mrf.mxu0
    %v1335 = vadd.f32 0.0, %v1334
    %1336 = vmatmul.bf16.gmra.mxu0 %v1271
    %v1337 = vpop.f32.mrf.mxu0
    %v1338 = vadd.f32 0.0, %v1337
    %v1339 = vpop.f32.mrf.mxu0
    %v1340 = vadd.f32 0.0, %v1339
    %1341 = vmatmul.bf16.gmra.mxu0 %v1272
    %v1342 = vpop.f32.mrf.mxu0
    %v1343 = vadd.f32 0.0, %v1342
    %v1344 = vpop.f32.mrf.mxu0
    %v1345 = vadd.f32 0.0, %v1344
    %1346 = vmatmul.bf16.gmra.mxu0 %v1273
    %v1347 = vpop.f32.mrf.mxu0
    %v1348 = vadd.f32 0.0, %v1347
    %v1349 = vpop.f32.mrf.mxu0
    %v1350 = vadd.f32 0.0, %v1349
    %1351 = vmatmul.bf16.gmra.mxu0 %v1274
    %v1352 = vpop.f32.mrf.mxu0
    %v1353 = vadd.f32 0.0, %v1352
    %v1354 = vpop.f32.mrf.mxu0
    %v1355 = vadd.f32 0.0, %v1354
    %1356 = vdwg.mxu0
    %v1373 = vunpack.c.l.b16 %v1222
    %v1374 = vunpack.c.l.b16 %v1223
    %v1375 = vunpack.c.l.b16 %v1224
    %v1376 = vunpack.c.l.b16 %v1225
    %v1377 = vunpack.c.l.b16 %v1226
    %v1378 = vunpack.c.l.b16 %v1227
    %v1379 = vunpack.c.l.b16 %v1228
    %v1380 = vunpack.c.l.b16 %v1229
    %v1381 = vunpack.c.l.b16 %v1230
    %v1382 = vunpack.c.l.b16 %v1231
    %v1383 = vunpack.c.l.b16 %v1232
    %v1384 = vunpack.c.l.b16 %v1233
    %v1385 = vunpack.c.l.b16 %v1234
    %v1386 = vunpack.c.l.b16 %v1235
    %v1387 = vunpack.c.l.b16 %v1236
    %v1388 = vunpack.c.l.b16 %v1237
    %v1389 = vpack.c.b16 %v1374, %v1373
    %v1390 = vpack.c.b16 %v1376, %v1375
    %v1391 = vpack.c.b16 %v1378, %v1377
    %v1392 = vpack.c.b16 %v1380, %v1379
    %v1393 = vpack.c.b16 %v1382, %v1381
    %v1394 = vpack.c.b16 %v1384, %v1383
    %v1395 = vpack.c.b16 %v1386, %v1385
    %v1396 = vpack.c.b16 %v1388, %v1387
    %1405 = vmatpush.bf16.msra.mxu0 %v1396
    %1406 = vmatpush.bf16.msra.mxu0 %v1395
    %1407 = vmatpush.bf16.msra.mxu0 %v1394
    %1408 = vmatpush.bf16.msra.mxu0 %v1393
    %1409 = vmatpush.bf16.msra.mxu0 %v1392
    %1410 = vmatpush.bf16.msra.mxu0 %v1391
    %1411 = vmatpush.bf16.msra.mxu0 %v1390
    %1412 = vmatpush.bf16.msra.mxu0 %v1389
    %1413 = vmatmul.bf16.gmra.mxu0 %v1238
    %v1414 = vpop.f32.mrf.mxu0
    %v1415 = vadd.f32 %v1333, %v1414
    %v1416 = vpop.f32.mrf.mxu0
    %v1417 = vadd.f32 %v1335, %v1416
    %1418 = vmatmul.bf16.gmra.mxu0 %v1239
    %v1419 = vpop.f32.mrf.mxu0
    %v1420 = vadd.f32 %v1338, %v1419
    %v1421 = vpop.f32.mrf.mxu0
    %v1422 = vadd.f32 %v1340, %v1421
    %1423 = vmatmul.bf16.gmra.mxu0 %v1240
    %v1424 = vpop.f32.mrf.mxu0
    %v1425 = vadd.f32 %v1343, %v1424
    %v1426 = vpop.f32.mrf.mxu0
    %v1427 = vadd.f32 %v1345, %v1426
    %1428 = vmatmul.bf16.gmra.mxu0 %v1241
    %v1429 = vpop.f32.mrf.mxu0
    %v1430 = vadd.f32 %v1348, %v1429
    %v1431 = vpop.f32.mrf.mxu0
    %v1432 = vadd.f32 %v1350, %v1431
    %1433 = vmatmul.bf16.gmra.mxu0 %v1242
    %v1434 = vpop.f32.mrf.mxu0
    %v1435 = vadd.f32 %v1353, %v1434
    %v1436 = vpop.f32.mrf.mxu0
    %v1437 = vadd.f32 %v1355, %v1436
    %1438 = vdwg.mxu0
    %v1439 = vld [vmem:[#allocation2 + $0x9] sm:$0xff]
    %v1440 = vld [vmem:[#allocation2 + $0x11] sm:$0xff]
    %v1441 = vld [vmem:[#allocation2 + $0x19] sm:$0xff]
    %v1442 = vld [vmem:[#allocation2 + $0x21] sm:$0xff]
    %v1443 = vld [vmem:[#allocation2 + $0x29] sm:$0xff]
    %v1444 = vld [vmem:[#allocation2 + $0x31] sm:$0xff]
    %v1445 = vld [vmem:[#allocation2 + $0x39] sm:$0xff]
    %v1446 = vld [vmem:[#allocation2 + $0x41] sm:$0xff]
    %v1447 = vld [vmem:[#allocation2 + $0x49] sm:$0xff]
    %v1448 = vld [vmem:[#allocation2 + $0x51] sm:$0xff]
    %s1449 = scalar_lea.vmem [#allocation6], 320
    %v1450 = vld [vmem:[%s1449] sm:$0xf]
    %v1451 = vld [vmem:[%s1449 + $0x4] sm:$0xf]
    %v1452 = vld [vmem:[%s1449 + $0x8] sm:$0xf]
    %v1453 = vld [vmem:[%s1449 + $0xc] sm:$0xf]
    %v1454 = vld [vmem:[%s1449 + $0x10] sm:$0xf]
    %v1455 = vld [vmem:[%s1449 + $0x14] sm:$0xf]
    %v1456 = vld [vmem:[%s1449 + $0x18] sm:$0xf]
    %v1457 = vld [vmem:[%s1449 + $0x1c] sm:$0xf]
    %v1458 = vld [vmem:[%s1449 + $0x20] sm:$0xf]
    %v1459 = vld [vmem:[%s1449 + $0x24] sm:$0xf]
    %v1460 = vld [vmem:[%s1449 + $0x28] sm:$0xf]
    %v1461 = vld [vmem:[%s1449 + $0x2c] sm:$0xf]
    %v1462 = vld [vmem:[%s1449 + $0x30] sm:$0xf]
    %v1463 = vld [vmem:[%s1449 + $0x34] sm:$0xf]
    %v1464 = vld [vmem:[%s1449 + $0x38] sm:$0xf]
    %v1465 = vld [vmem:[%s1449 + $0x3c] sm:$0xf]
    %v1466 = vpack.c.bf16 %v1440, %v1439
    %v1467 = vpack.c.bf16 %v1442, %v1441
    %v1468 = vpack.c.bf16 %v1444, %v1443
    %v1469 = vpack.c.bf16 %v1446, %v1445
    %v1470 = vpack.c.bf16 %v1448, %v1447
    %v1487 = vunpack.c.l.b16 %v1450
    %v1488 = vunpack.c.l.b16 %v1451
    %v1489 = vunpack.c.l.b16 %v1452
    %v1490 = vunpack.c.l.b16 %v1453
    %v1491 = vunpack.c.l.b16 %v1454
    %v1492 = vunpack.c.l.b16 %v1455
    %v1493 = vunpack.c.l.b16 %v1456
    %v1494 = vunpack.c.l.b16 %v1457
    %v1495 = vunpack.c.l.b16 %v1458
    %v1496 = vunpack.c.l.b16 %v1459
    %v1497 = vunpack.c.l.b16 %v1460
    %v1498 = vunpack.c.l.b16 %v1461
    %v1499 = vunpack.c.l.b16 %v1462
    %v1500 = vunpack.c.l.b16 %v1463
    %v1501 = vunpack.c.l.b16 %v1464
    %v1502 = vunpack.c.l.b16 %v1465
    %v1503 = vpack.c.b16 %v1488, %v1487
    %v1504 = vpack.c.b16 %v1490, %v1489
    %v1505 = vpack.c.b16 %v1492, %v1491
    %v1506 = vpack.c.b16 %v1494, %v1493
    %v1507 = vpack.c.b16 %v1496, %v1495
    %v1508 = vpack.c.b16 %v1498, %v1497
    %v1509 = vpack.c.b16 %v1500, %v1499
    %v1510 = vpack.c.b16 %v1502, %v1501
    %1519 = vmatpush.bf16.msra.mxu0 %v1510
    %1520 = vmatpush.bf16.msra.mxu0 %v1509
    %1521 = vmatpush.bf16.msra.mxu0 %v1508
    %1522 = vmatpush.bf16.msra.mxu0 %v1507
    %1523 = vmatpush.bf16.msra.mxu0 %v1506
    %1524 = vmatpush.bf16.msra.mxu0 %v1505
    %1525 = vmatpush.bf16.msra.mxu0 %v1504
    %1526 = vmatpush.bf16.msra.mxu0 %v1503
    %1527 = vmatmul.bf16.gmra.mxu0 %v1466
    %v1528 = vpop.f32.mrf.mxu0
    %v1529 = vadd.f32 0.0, %v1528
    %v1530 = vpop.f32.mrf.mxu0
    %v1531 = vadd.f32 0.0, %v1530
    %1532 = vmatmul.bf16.gmra.mxu0 %v1467
    %v1533 = vpop.f32.mrf.mxu0
    %v1534 = vadd.f32 0.0, %v1533
    %v1535 = vpop.f32.mrf.mxu0
    %v1536 = vadd.f32 0.0, %v1535
    %1537 = vmatmul.bf16.gmra.mxu0 %v1468
    %v1538 = vpop.f32.mrf.mxu0
    %v1539 = vadd.f32 0.0, %v1538
    %v1540 = vpop.f32.mrf.mxu0
    %v1541 = vadd.f32 0.0, %v1540
    %1542 = vmatmul.bf16.gmra.mxu0 %v1469
    %v1543 = vpop.f32.mrf.mxu0
    %v1544 = vadd.f32 0.0, %v1543
    %v1545 = vpop.f32.mrf.mxu0
    %v1546 = vadd.f32 0.0, %v1545
    %1547 = vmatmul.bf16.gmra.mxu0 %v1470
    %v1548 = vpop.f32.mrf.mxu0
    %v1549 = vadd.f32 0.0, %v1548
    %v1550 = vpop.f32.mrf.mxu0
    %v1551 = vadd.f32 0.0, %v1550
    %1552 = vdwg.mxu0
    %v1553 = vadd.f32 %v1415, %v1529
    %v1554 = vadd.f32 %v1417, %v1531
    %v1555 = vadd.f32 %v1420, %v1534
    %v1556 = vadd.f32 %v1422, %v1536
    %v1557 = vadd.f32 %v1425, %v1539
    %v1558 = vadd.f32 %v1427, %v1541
    %v1559 = vadd.f32 %v1430, %v1544
    %v1560 = vadd.f32 %v1432, %v1546
    %v1561 = vadd.f32 %v1435, %v1549
    %v1562 = vadd.f32 %v1437, %v1551
    %v1563 = vadd.f32 %v1553, %v1200
    %v1564 = vadd.f32 %v1554, %v1200
    %v1565 = vadd.f32 %v1555, %v1200
    %v1566 = vadd.f32 %v1556, %v1200
    %v1567 = vadd.f32 %v1557, %v1200
    %v1568 = vadd.f32 %v1558, %v1200
    %v1569 = vadd.f32 %v1559, %v1200
    %v1570 = vadd.f32 %v1560, %v1200
    %v1571 = vadd.f32 %v1561, %v1200
    %v1572 = vadd.f32 %v1562, %v1200
    %v1573 = vmax.f32 %v1563, 0.0
    %v1574 = vmax.f32 %v1564, 0.0
    %v1575 = vmax.f32 %v1565, 0.0
    %v1576 = vmax.f32 %v1566, 0.0
    %v1577 = vmax.f32 %v1567, 0.0
    %v1578 = vmax.f32 %v1568, 0.0
    %v1579 = vmax.f32 %v1569, 0.0
    %v1580 = vmax.f32 %v1570, 0.0
    %v1581 = vmax.f32 %v1571, 0.0
    %v1582 = vmax.f32 %v1572, 0.0
    %v1583 = vadd.f32 %v1190, %v1573
    %v1584 = vadd.f32 %v1191, %v1574
    %v1585 = vadd.f32 %v1192, %v1575
    %v1586 = vadd.f32 %v1193, %v1576
    %v1587 = vadd.f32 %v1194, %v1577
    %v1588 = vadd.f32 %v1195, %v1578
    %v1589 = vadd.f32 %v1196, %v1579
    %v1590 = vadd.f32 %v1197, %v1580
    %v1591 = vadd.f32 %v1198, %v1581
    %v1592 = vadd.f32 %v1199, %v1582
    %v1593 = vld [vmem:[#allocation11 + $0x6] ss:$0 sm:$0xff]
    %v1594 = vadd.f32 %v1583, %v1588
    %v1595 = vadd.f32 %v1584, %v1589
    %v1596 = vadd.f32 %v1585, %v1590
    %v1597 = vadd.f32 %v1586, %v1591
    %v1598 = vadd.f32 %v1587, %v1592
    %v1599 = vmul.f32 %v1593, %v1594
    %v1600 = vmul.f32 %v1593, %v1595
    %v1601 = vmul.f32 %v1593, %v1596
    %v1602 = vmul.f32 %v1593, %v1597
    %v1603 = vmul.f32 %v1593, %v1598
    %v1604 = vsub.f32 1.0, %v1593
    %v1605 = vsub.f32 %v1583, %v1588
    %v1606 = vsub.f32 %v1584, %v1589
    %v1607 = vsub.f32 %v1585, %v1590
    %v1608 = vsub.f32 %v1586, %v1591
    %v1609 = vsub.f32 %v1587, %v1592
    %v1610 = vand.u32 2147483647, %v1605
    %v1611 = vand.u32 2147483647, %v1606
    %v1612 = vand.u32 2147483647, %v1607
    %v1613 = vand.u32 2147483647, %v1608
    %v1614 = vand.u32 2147483647, %v1609
    %v1615 = vmul.f32 %v1604, %v1610
    %v1616 = vmul.f32 %v1604, %v1611
    %v1617 = vmul.f32 %v1604, %v1612
    %v1618 = vmul.f32 %v1604, %v1613
    %v1619 = vmul.f32 %v1604, %v1614
    %v1620 = vadd.f32 %v1599, %v1615
    %v1621 = vadd.f32 %v1600, %v1616
    %v1622 = vadd.f32 %v1601, %v1617
    %v1623 = vadd.f32 %v1602, %v1618
    %v1624 = vadd.f32 %v1603, %v1619
    %v1625 = vld [vmem:[#allocation9] sm:$0xff]
    %v1626 = vld [vmem:[#allocation9 + $0x8] sm:$0xff]
    %v1627 = vld [vmem:[#allocation9 + $0x10] sm:$0xff]
    %v1628 = vld [vmem:[#allocation9 + $0x18] sm:$0xff]
    %v1629 = vld [vmem:[#allocation9 + $0x20] sm:$0xff]
    %v1630 = vld [vmem:[#allocation9 + $0x28] sm:$0xff]
    %v1631 = vld [vmem:[#allocation9 + $0x30] sm:$0xff]
    %v1632 = vld [vmem:[#allocation9 + $0x38] sm:$0xff]
    %v1633 = vld [vmem:[#allocation9 + $0x40] sm:$0xff]
    %v1634 = vld [vmem:[#allocation9 + $0x48] sm:$0xff]
    %v1635 = vld [vmem:[#allocation9 + $0x50] sm:$0xff]
    %v1636 = vld [vmem:[#allocation9 + $0x58] sm:$0xff]
    %v1637 = vld [vmem:[#allocation9 + $0x60] sm:$0xff]
    %v1638 = vld [vmem:[#allocation9 + $0x68] sm:$0xff]
    %v1639 = vld [vmem:[#allocation9 + $0x70] sm:$0xff]
    %v1640 = vld [vmem:[#allocation9 + $0x78] sm:$0xff]
    %v1641 = vpack.c.bf16 %v1621, %v1620
    %v1642 = vpack.c.bf16 %v1623, %v1622
    %v1643 = vpack.c.bf16 %v1624, %v1624
    %s1644 = scalar_lea.vmem [#allocation11], 4
    %v1645 = vld [vmem:[%s1644] ss:$8 sm:$0x3]
    %v1647 = vperm.slane %v1645, 0
    %v1648 = vperm.slane %v1645, 1
    %v1667 = vunpack.c.l.b16 %v1625
    %v1668 = vunpack.c.h.b16 %v1625
    %v1669 = vunpack.c.l.b16 %v1626
    %v1670 = vunpack.c.h.b16 %v1626
    %v1671 = vunpack.c.l.b16 %v1627
    %v1672 = vunpack.c.h.b16 %v1627
    %v1673 = vunpack.c.l.b16 %v1628
    %v1674 = vunpack.c.h.b16 %v1628
    %v1675 = vunpack.c.l.b16 %v1629
    %v1676 = vunpack.c.h.b16 %v1629
    %v1677 = vunpack.c.l.b16 %v1630
    %v1678 = vunpack.c.h.b16 %v1630
    %v1679 = vunpack.c.l.b16 %v1631
    %v1680 = vunpack.c.h.b16 %v1631
    %v1681 = vunpack.c.l.b16 %v1632
    %v1682 = vunpack.c.h.b16 %v1632
    %v1683 = vunpack.c.l.b16 %v1633
    %v1684 = vunpack.c.h.b16 %v1633
    %v1685 = vunpack.c.l.b16 %v1634
    %v1686 = vunpack.c.h.b16 %v1634
    %v1687 = vunpack.c.l.b16 %v1635
    %v1688 = vunpack.c.h.b16 %v1635
    %v1689 = vunpack.c.l.b16 %v1636
    %v1690 = vunpack.c.h.b16 %v1636
    %v1691 = vunpack.c.l.b16 %v1637
    %v1692 = vunpack.c.h.b16 %v1637
    %v1693 = vunpack.c.l.b16 %v1638
    %v1694 = vunpack.c.h.b16 %v1638
    %v1695 = vunpack.c.l.b16 %v1639
    %v1696 = vunpack.c.h.b16 %v1639
    %v1697 = vunpack.c.l.b16 %v1640
    %v1698 = vunpack.c.h.b16 %v1640
    %v1699 = vpack.c.b16 %v1669, %v1667
    %v1700 = vpack.c.b16 %v1670, %v1668
    %v1701 = vpack.c.b16 %v1673, %v1671
    %v1702 = vpack.c.b16 %v1674, %v1672
    %v1703 = vpack.c.b16 %v1677, %v1675
    %v1704 = vpack.c.b16 %v1678, %v1676
    %v1705 = vpack.c.b16 %v1681, %v1679
    %v1706 = vpack.c.b16 %v1682, %v1680
    %v1707 = vpack.c.b16 %v1685, %v1683
    %v1708 = vpack.c.b16 %v1686, %v1684
    %v1709 = vpack.c.b16 %v1689, %v1687
    %v1710 = vpack.c.b16 %v1690, %v1688
    %v1711 = vpack.c.b16 %v1693, %v1691
    %v1712 = vpack.c.b16 %v1694, %v1692
    %v1713 = vpack.c.b16 %v1697, %v1695
    %v1714 = vpack.c.b16 %v1698, %v1696
    %1731 = vmatpush.bf16.msra.mxu0 %v1713
    %1732 = vmatpush.bf16.msra.mxu0 %v1711
    %1733 = vmatpush.bf16.msra.mxu0 %v1709
    %1734 = vmatpush.bf16.msra.mxu0 %v1707
    %1735 = vmatpush.bf16.msra.mxu0 %v1705
    %1736 = vmatpush.bf16.msra.mxu0 %v1703
    %1737 = vmatpush.bf16.msra.mxu0 %v1701
    %1738 = vmatpush.bf16.msra.mxu0 %v1699
    %1739 = vmatmul.bf16.gmra.mxu0 %v1641
    %v1740 = vpop.f32.mrf.mxu0
    %v1741 = vadd.f32 %v1647, %v1740
    %v1742 = vpop.f32.mrf.mxu0
    %v1743 = vadd.f32 %v1647, %v1742
    %1744 = vmatmul.bf16.gmra.mxu0 %v1642
    %v1745 = vpop.f32.mrf.mxu0
    %v1746 = vadd.f32 %v1647, %v1745
    %v1747 = vpop.f32.mrf.mxu0
    %v1748 = vadd.f32 %v1647, %v1747
    %1749 = vmatmul.bf16.gmra.mxu0 %v1643
    %v1750 = vpop.f32.mrf.mxu0
    %v1751 = vadd.f32 %v1647, %v1750
    %v1752 = vpop.f32.mrf.mxu0
    %1753 = vdwg.mxu0
    %1754 = vmatpush.bf16.msra.mxu0 %v1714
    %1755 = vmatpush.bf16.msra.mxu0 %v1712
    %1756 = vmatpush.bf16.msra.mxu0 %v1710
    %1757 = vmatpush.bf16.msra.mxu0 %v1708
    %1758 = vmatpush.bf16.msra.mxu0 %v1706
    %1759 = vmatpush.bf16.msra.mxu0 %v1704
    %1760 = vmatpush.bf16.msra.mxu0 %v1702
    %1761 = vmatpush.bf16.msra.mxu0 %v1700
    %1762 = vmatmul.bf16.gmra.mxu0 %v1641
    %v1763 = vpop.f32.mrf.mxu0
    %v1764 = vadd.f32 %v1648, %v1763
    %v1765 = vpop.f32.mrf.mxu0
    %v1766 = vadd.f32 %v1648, %v1765
    %1767 = vmatmul.bf16.gmra.mxu0 %v1642
    %v1768 = vpop.f32.mrf.mxu0
    %v1769 = vadd.f32 %v1648, %v1768
    %v1770 = vpop.f32.mrf.mxu0
    %v1771 = vadd.f32 %v1648, %v1770
    %1772 = vmatmul.bf16.gmra.mxu0 %v1643
    %v1773 = vpop.f32.mrf.mxu0
    %v1774 = vadd.f32 %v1648, %v1773
    %v1775 = vpop.f32.mrf.mxu0
    %1776 = vdwg.mxu0
    %v1777 = vmax.f32 %v1741, 0.0
    %v1778 = vmax.f32 %v1764, 0.0
    %v1779 = vmax.f32 %v1743, 0.0
    %v1780 = vmax.f32 %v1766, 0.0
    %v1781 = vmax.f32 %v1746, 0.0
    %v1782 = vmax.f32 %v1769, 0.0
    %v1783 = vmax.f32 %v1748, 0.0
    %v1784 = vmax.f32 %v1771, 0.0
    %v1785 = vmax.f32 %v1751, 0.0
    %v1786 = vmax.f32 %v1774, 0.0
    %v1787 = vmul.f32 %v1778, %v287
    %v1788 = vmul.f32 %v1780, %v288
    %v1789 = vmul.f32 %v1782, %v289
    %v1790 = vmul.f32 %v1784, %v290
    %v1791 = vmul.f32 %v1786, %v291
    %v1792 = vld [vmem:[#allocation11 + $0x5] ss:$0 sm:$0xff]
    %1793 = vst [vmem:[#allocation2 + $0x8] sm:$0xff] %v1787
    %1794 = vst [vmem:[#allocation2 + $0x10] sm:$0xff] %v1788
    %1795 = vst [vmem:[#allocation2 + $0x18] sm:$0xff] %v1789
    %1796 = vst [vmem:[#allocation2 + $0x20] sm:$0xff] %v1790
    %1797 = vst [vmem:[#allocation2 + $0x28] sm:$0xff] %v1791
    %v1798 = vld [vmem:[#allocation2 + $0x7] sm:$0xff]
    %v1799 = vld [vmem:[#allocation2 + $0xf] sm:$0xff]
    %v1800 = vld [vmem:[#allocation2 + $0x17] sm:$0xff]
    %v1801 = vld [vmem:[#allocation2 + $0x1f] sm:$0xff]
    %v1802 = vld [vmem:[#allocation2 + $0x27] sm:$0xff]
    %v1803 = vld [vmem:[#allocation8] sm:$0xf]
    %v1804 = vld [vmem:[#allocation8 + $0x4] sm:$0xf]
    %v1805 = vld [vmem:[#allocation8 + $0x8] sm:$0xf]
    %v1806 = vld [vmem:[#allocation8 + $0xc] sm:$0xf]
    %v1807 = vld [vmem:[#allocation8 + $0x10] sm:$0xf]
    %v1808 = vld [vmem:[#allocation8 + $0x14] sm:$0xf]
    %v1809 = vld [vmem:[#allocation8 + $0x18] sm:$0xf]
    %v1810 = vld [vmem:[#allocation8 + $0x1c] sm:$0xf]
    %v1811 = vld [vmem:[#allocation8 + $0x20] sm:$0xf]
    %v1812 = vld [vmem:[#allocation8 + $0x24] sm:$0xf]
    %v1813 = vld [vmem:[#allocation8 + $0x28] sm:$0xf]
    %v1814 = vld [vmem:[#allocation8 + $0x2c] sm:$0xf]
    %v1815 = vld [vmem:[#allocation8 + $0x30] sm:$0xf]
    %v1816 = vld [vmem:[#allocation8 + $0x34] sm:$0xf]
    %v1817 = vld [vmem:[#allocation8 + $0x38] sm:$0xf]
    %v1818 = vld [vmem:[#allocation8 + $0x3c] sm:$0xf]
    %v1819 = vpack.c.bf16 %v1799, %v1798
    %v1820 = vpack.c.bf16 %v1801, %v1800
    %v1821 = vpack.c.bf16 %v1802, %v1802
    %v1822 = vld [vmem:[#allocation2 + $0x8] sm:$0xff]
    %v1823 = vld [vmem:[#allocation2 + $0x10] sm:$0xff]
    %v1824 = vld [vmem:[#allocation2 + $0x18] sm:$0xff]
    %v1825 = vld [vmem:[#allocation2 + $0x20] sm:$0xff]
    %v1826 = vld [vmem:[#allocation2 + $0x28] sm:$0xff]
    %s1827 = scalar_lea.vmem [#allocation8], 64
    %v1828 = vld [vmem:[%s1827] sm:$0xf]
    %v1829 = vld [vmem:[%s1827 + $0x4] sm:$0xf]
    %v1830 = vld [vmem:[%s1827 + $0x8] sm:$0xf]
    %v1831 = vld [vmem:[%s1827 + $0xc] sm:$0xf]
    %v1832 = vld [vmem:[%s1827 + $0x10] sm:$0xf]
    %v1833 = vld [vmem:[%s1827 + $0x14] sm:$0xf]
    %v1834 = vld [vmem:[%s1827 + $0x18] sm:$0xf]
    %v1835 = vld [vmem:[%s1827 + $0x1c] sm:$0xf]
    %v1836 = vld [vmem:[%s1827 + $0x20] sm:$0xf]
    %v1837 = vld [vmem:[%s1827 + $0x24] sm:$0xf]
    %v1838 = vld [vmem:[%s1827 + $0x28] sm:$0xf]
    %v1839 = vld [vmem:[%s1827 + $0x2c] sm:$0xf]
    %v1840 = vld [vmem:[%s1827 + $0x30] sm:$0xf]
    %v1841 = vld [vmem:[%s1827 + $0x34] sm:$0xf]
    %v1842 = vld [vmem:[%s1827 + $0x38] sm:$0xf]
    %v1843 = vld [vmem:[%s1827 + $0x3c] sm:$0xf]
    %v1844 = vpack.c.bf16 %v1823, %v1822
    %v1845 = vpack.c.bf16 %v1825, %v1824
    %v1846 = vpack.c.bf16 %v1826, %v1826
    %v1863 = vunpack.c.l.b16 %v1828
    %v1864 = vunpack.c.l.b16 %v1829
    %v1865 = vunpack.c.l.b16 %v1830
    %v1866 = vunpack.c.l.b16 %v1831
    %v1867 = vunpack.c.l.b16 %v1832
    %v1868 = vunpack.c.l.b16 %v1833
    %v1869 = vunpack.c.l.b16 %v1834
    %v1870 = vunpack.c.l.b16 %v1835
    %v1871 = vunpack.c.l.b16 %v1836
    %v1872 = vunpack.c.l.b16 %v1837
    %v1873 = vunpack.c.l.b16 %v1838
    %v1874 = vunpack.c.l.b16 %v1839
    %v1875 = vunpack.c.l.b16 %v1840
    %v1876 = vunpack.c.l.b16 %v1841
    %v1877 = vunpack.c.l.b16 %v1842
    %v1878 = vunpack.c.l.b16 %v1843
    %v1879 = vpack.c.b16 %v1864, %v1863
    %v1880 = vpack.c.b16 %v1866, %v1865
    %v1881 = vpack.c.b16 %v1868, %v1867
    %v1882 = vpack.c.b16 %v1870, %v1869
    %v1883 = vpack.c.b16 %v1872, %v1871
    %v1884 = vpack.c.b16 %v1874, %v1873
    %v1885 = vpack.c.b16 %v1876, %v1875
    %v1886 = vpack.c.b16 %v1878, %v1877
    %1895 = vmatpush.bf16.msra.mxu0 %v1886
    %1896 = vmatpush.bf16.msra.mxu0 %v1885
    %1897 = vmatpush.bf16.msra.mxu0 %v1884
    %1898 = vmatpush.bf16.msra.mxu0 %v1883
    %1899 = vmatpush.bf16.msra.mxu0 %v1882
    %1900 = vmatpush.bf16.msra.mxu0 %v1881
    %1901 = vmatpush.bf16.msra.mxu0 %v1880
    %1902 = vmatpush.bf16.msra.mxu0 %v1879
    %1903 = vmatmul.bf16.gmra.mxu0 %v1844
    %v1904 = vpop.f32.mrf.mxu0
    %v1905 = vadd.f32 0.0, %v1904
    %v1906 = vpop.f32.mrf.mxu0
    %v1907 = vadd.f32 0.0, %v1906
    %1908 = vmatmul.bf16.gmra.mxu0 %v1845
    %v1909 = vpop.f32.mrf.mxu0
    %v1910 = vadd.f32 0.0, %v1909
    %v1911 = vpop.f32.mrf.mxu0
    %v1912 = vadd.f32 0.0, %v1911
    %1913 = vmatmul.bf16.gmra.mxu0 %v1846
    %v1914 = vpop.f32.mrf.mxu0
    %v1915 = vadd.f32 0.0, %v1914
    %v1916 = vpop.f32.mrf.mxu0
    %1917 = vdwg.mxu0
    %v1934 = vunpack.c.l.b16 %v1803
    %v1935 = vunpack.c.l.b16 %v1804
    %v1936 = vunpack.c.l.b16 %v1805
    %v1937 = vunpack.c.l.b16 %v1806
    %v1938 = vunpack.c.l.b16 %v1807
    %v1939 = vunpack.c.l.b16 %v1808
    %v1940 = vunpack.c.l.b16 %v1809
    %v1941 = vunpack.c.l.b16 %v1810
    %v1942 = vunpack.c.l.b16 %v1811
    %v1943 = vunpack.c.l.b16 %v1812
    %v1944 = vunpack.c.l.b16 %v1813
    %v1945 = vunpack.c.l.b16 %v1814
    %v1946 = vunpack.c.l.b16 %v1815
    %v1947 = vunpack.c.l.b16 %v1816
    %v1948 = vunpack.c.l.b16 %v1817
    %v1949 = vunpack.c.l.b16 %v1818
    %v1950 = vpack.c.b16 %v1935, %v1934
    %v1951 = vpack.c.b16 %v1937, %v1936
    %v1952 = vpack.c.b16 %v1939, %v1938
    %v1953 = vpack.c.b16 %v1941, %v1940
    %v1954 = vpack.c.b16 %v1943, %v1942
    %v1955 = vpack.c.b16 %v1945, %v1944
    %v1956 = vpack.c.b16 %v1947, %v1946
    %v1957 = vpack.c.b16 %v1949, %v1948
    %1966 = vmatpush.bf16.msra.mxu0 %v1957
    %1967 = vmatpush.bf16.msra.mxu0 %v1956
    %1968 = vmatpush.bf16.msra.mxu0 %v1955
    %1969 = vmatpush.bf16.msra.mxu0 %v1954
    %1970 = vmatpush.bf16.msra.mxu0 %v1953
    %1971 = vmatpush.bf16.msra.mxu0 %v1952
    %1972 = vmatpush.bf16.msra.mxu0 %v1951
    %1973 = vmatpush.bf16.msra.mxu0 %v1950
    %1974 = vmatmul.bf16.gmra.mxu0 %v1819
    %v1975 = vpop.f32.mrf.mxu0
    %v1976 = vadd.f32 %v1905, %v1975
    %v1977 = vpop.f32.mrf.mxu0
    %v1978 = vadd.f32 %v1907, %v1977
    %1979 = vmatmul.bf16.gmra.mxu0 %v1820
    %v1980 = vpop.f32.mrf.mxu0
    %v1981 = vadd.f32 %v1910, %v1980
    %v1982 = vpop.f32.mrf.mxu0
    %v1983 = vadd.f32 %v1912, %v1982
    %1984 = vmatmul.bf16.gmra.mxu0 %v1821
    %v1985 = vpop.f32.mrf.mxu0
    %v1986 = vadd.f32 %v1915, %v1985
    %v1987 = vpop.f32.mrf.mxu0
    %1988 = vdwg.mxu0
    %v1989 = vld [vmem:[#allocation2 + $0x9] sm:$0xff]
    %v1990 = vld [vmem:[#allocation2 + $0x11] sm:$0xff]
    %v1991 = vld [vmem:[#allocation2 + $0x19] sm:$0xff]
    %v1992 = vld [vmem:[#allocation2 + $0x21] sm:$0xff]
    %v1993 = vld [vmem:[#allocation2 + $0x29] sm:$0xff]
    %s1994 = scalar_lea.vmem [#allocation8], 128
    %v1995 = vld [vmem:[%s1994] sm:$0xf]
    %v1996 = vld [vmem:[%s1994 + $0x4] sm:$0xf]
    %v1997 = vld [vmem:[%s1994 + $0x8] sm:$0xf]
    %v1998 = vld [vmem:[%s1994 + $0xc] sm:$0xf]
    %v1999 = vld [vmem:[%s1994 + $0x10] sm:$0xf]
    %v2000 = vld [vmem:[%s1994 + $0x14] sm:$0xf]
    %v2001 = vld [vmem:[%s1994 + $0x18] sm:$0xf]
    %v2002 = vld [vmem:[%s1994 + $0x1c] sm:$0xf]
    %v2003 = vld [vmem:[%s1994 + $0x20] sm:$0xf]
    %v2004 = vld [vmem:[%s1994 + $0x24] sm:$0xf]
    %v2005 = vld [vmem:[%s1994 + $0x28] sm:$0xf]
    %v2006 = vld [vmem:[%s1994 + $0x2c] sm:$0xf]
    %v2007 = vld [vmem:[%s1994 + $0x30] sm:$0xf]
    %v2008 = vld [vmem:[%s1994 + $0x34] sm:$0xf]
    %v2009 = vld [vmem:[%s1994 + $0x38] sm:$0xf]
    %v2010 = vld [vmem:[%s1994 + $0x3c] sm:$0xf]
    %v2011 = vpack.c.bf16 %v1990, %v1989
    %v2012 = vpack.c.bf16 %v1992, %v1991
    %v2013 = vpack.c.bf16 %v1993, %v1993
    %v2030 = vunpack.c.l.b16 %v1995
    %v2031 = vunpack.c.l.b16 %v1996
    %v2032 = vunpack.c.l.b16 %v1997
    %v2033 = vunpack.c.l.b16 %v1998
    %v2034 = vunpack.c.l.b16 %v1999
    %v2035 = vunpack.c.l.b16 %v2000
    %v2036 = vunpack.c.l.b16 %v2001
    %v2037 = vunpack.c.l.b16 %v2002
    %v2038 = vunpack.c.l.b16 %v2003
    %v2039 = vunpack.c.l.b16 %v2004
    %v2040 = vunpack.c.l.b16 %v2005
    %v2041 = vunpack.c.l.b16 %v2006
    %v2042 = vunpack.c.l.b16 %v2007
    %v2043 = vunpack.c.l.b16 %v2008
    %v2044 = vunpack.c.l.b16 %v2009
    %v2045 = vunpack.c.l.b16 %v2010
    %v2046 = vpack.c.b16 %v2031, %v2030
    %v2047 = vpack.c.b16 %v2033, %v2032
    %v2048 = vpack.c.b16 %v2035, %v2034
    %v2049 = vpack.c.b16 %v2037, %v2036
    %v2050 = vpack.c.b16 %v2039, %v2038
    %v2051 = vpack.c.b16 %v2041, %v2040
    %v2052 = vpack.c.b16 %v2043, %v2042
    %v2053 = vpack.c.b16 %v2045, %v2044
    %2062 = vmatpush.bf16.msra.mxu0 %v2053
    %2063 = vmatpush.bf16.msra.mxu0 %v2052
    %2064 = vmatpush.bf16.msra.mxu0 %v2051
    %2065 = vmatpush.bf16.msra.mxu0 %v2050
    %2066 = vmatpush.bf16.msra.mxu0 %v2049
    %2067 = vmatpush.bf16.msra.mxu0 %v2048
    %2068 = vmatpush.bf16.msra.mxu0 %v2047
    %2069 = vmatpush.bf16.msra.mxu0 %v2046
    %2070 = vmatmul.bf16.gmra.mxu0 %v2011
    %v2071 = vpop.f32.mrf.mxu0
    %v2072 = vadd.f32 0.0, %v2071
    %v2073 = vpop.f32.mrf.mxu0
    %v2074 = vadd.f32 0.0, %v2073
    %2075 = vmatmul.bf16.gmra.mxu0 %v2012
    %v2076 = vpop.f32.mrf.mxu0
    %v2077 = vadd.f32 0.0, %v2076
    %v2078 = vpop.f32.mrf.mxu0
    %v2079 = vadd.f32 0.0, %v2078
    %2080 = vmatmul.bf16.gmra.mxu0 %v2013
    %v2081 = vpop.f32.mrf.mxu0
    %v2082 = vadd.f32 0.0, %v2081
    %v2083 = vpop.f32.mrf.mxu0
    %2084 = vdwg.mxu0
    %v2085 = vadd.f32 %v1976, %v2072
    %v2086 = vadd.f32 %v1978, %v2074
    %v2087 = vadd.f32 %v1981, %v2077
    %v2088 = vadd.f32 %v1983, %v2079
    %v2089 = vadd.f32 %v1986, %v2082
    %v2090 = vadd.f32 %v2085, %v1792
    %v2091 = vadd.f32 %v2086, %v1792
    %v2092 = vadd.f32 %v2087, %v1792
    %v2093 = vadd.f32 %v2088, %v1792
    %v2094 = vadd.f32 %v2089, %v1792
    %v2095 = vmax.f32 %v2090, 0.0
    %v2096 = vmax.f32 %v2091, 0.0
    %v2097 = vmax.f32 %v2092, 0.0
    %v2098 = vmax.f32 %v2093, 0.0
    %v2099 = vmax.f32 %v2094, 0.0
    %v2100 = vadd.f32 %v2095, %v1777
    %v2101 = vadd.f32 %v2096, %v1779
    %v2102 = vadd.f32 %v2097, %v1781
    %v2103 = vadd.f32 %v2098, %v1783
    %v2104 = vadd.f32 %v2099, %v1785
    %2105 = vst [vmem:[#allocation12] sm:$0xff] %v2100
    %2106 = vst [vmem:[#allocation12 + $0x8] sm:$0xff] %v2101
    %2107 = vst [vmem:[#allocation12 + $0x10] sm:$0xff] %v2102
    %2108 = vst [vmem:[#allocation12 + $0x18] sm:$0xff] %v2103
    %2109 = vst [vmem:[#allocation12 + $0x20] sm:$0xff] %v2104
    // Predicated region
    $region50: #{tpu_custom_call.1} parent=1 // pred_check
      _
    $region51: #{tpu_custom_call.1} parent=1 // pred_check_branch
      %2111 = sbr.rel (0) target = $region53
    $region52: #{tpu_custom_call.1} parent=1 // pred_region
      %2113 = vsyncadd [#allocation5], 0
      %s2114 = sshll.u32 [#allocation12], 4
      %s2115 = int_to_ptr.vmem [resolvable:$true] %s2114
      %s2116 = sshll.u32 %s7, 4
      %s2117 = int_to_ptr.hbm [resolvable:$true] %s2116
      %2122 = dma.vmem_to_hbm [thread:$0]  %s2115, 640, %s2117, [#allocation5], 128, 128, 8
    $region53: #{tpu_custom_call.1} parent=1 // pred_fallthru
      _
    // Predicated region
    $region54: #{tpu_custom_call.1} parent=1 // pred_check
      _
    $region55: #{tpu_custom_call.1} parent=1 // pred_check_branch
      %2124 = sbr.rel (0) target = $region57
    $region56: #{tpu_custom_call.1} parent=1 // pred_region
      %2126 = dma.done [#allocation5], 640
    $region57: #{tpu_custom_call.1} parent=1 // pred_fallthru
      _
    %2127 = vsyncpa [#allocation4], 1
    %2128 = vsyncpa [#allocation7], 1
    %2129 = vsyncpa [#allocation10], 1
    %2130 = vsyncpa [#allocation5], 1

</llo_original>
